<compile_context>
chip_gen: v7x
topology: tpu7x:2x2x1
jax: 0.10.0
libtpu: 0.0.40
codegen_flags: <defaults>
</compile_context>

<pallas_src>
import functools

import jax
import jax.numpy as jnp
from jax import lax
from jax.experimental import pallas as pl
from jax.experimental.pallas import tpu as pltpu

EPS = 1e-5  # PyTorch BatchNorm2d default


def _silu(x):
    return x * jax.nn.sigmoid(x)


# ----------------------------- fused kernel body -----------------------------

def _mbblock_body(x2d, imask, kmask, expand_wb, wd, bd, w1, b1, w2, b2, wp, bp,
                  o_ref, *, K, Wp, Lv, pad, inv_cnt, use_residual):
    """Fused MBConv on one batch image, channel-major / lane-dense layout.

    x2d:   (Cin, L)   zero-padded input image, padded spatial flattened on lanes
    imask: (1, L)     1.0 at interior (non-padding) positions, 0.0 on the halo
    kmask: (1, Lv)    1.0 at kept (strided, valid) output positions
    All conv weights are channel-first with eval-mode BN pre-folded; biases (C,1).
    """
    # 1) expand 1x1 conv + BN + SiLU (skipped when expand_ratio == 1)
    if expand_wb is not None:
        we, be = expand_wb
        ye = jnp.dot(we, x2d, preferred_element_type=jnp.float32) + be
        ye = _silu(ye) * imask       # re-zero the halo ring: SiLU(bias) != 0 there
    else:
        ye = x2d                     # halo already zero (input was zero-padded)

    # 2) depthwise KxK conv: K*K statically shifted lane slices over the padded
    #    grid; only the "valid" flat window of length Lv is kept downstream.
    hidden = ye.shape[0]
    acc = jnp.zeros((hidden, Lv), jnp.float32)
    for ky in range(K):
        for kx in range(K):
            off = ky * Wp + kx
            tap = lax.slice_in_dim(ye, off, off + Lv, axis=1)              # (hidden, Lv)
            t = ky * K + kx
            w_t = lax.slice_in_dim(wd, t, t + 1, axis=1)                   # (hidden, 1)
            acc = acc + tap * w_t
    yd = _silu(acc + bd)             # BN + SiLU; garbage at non-kept columns (masked)

    # 3) squeeze-excitation: masked global-avg-pool -> FC -> SiLU -> FC -> sigmoid
    pooled = jnp.sum(yd * kmask, axis=1, keepdims=True) * inv_cnt          # (hidden, 1)
    h = _silu(jnp.dot(w1, pooled, preferred_element_type=jnp.float32) + b1)
    s = jax.nn.sigmoid(jnp.dot(w2, h, preferred_element_type=jnp.float32) + b2)

    # 4) pointwise 1x1 conv + BN, SE scale fused into the activation (+ residual)
    out = jnp.dot(wp, yd * s, preferred_element_type=jnp.float32) + bp     # (Cout, Lv)
    if use_residual:
        r0 = pad * (Wp + 1)          # original (unpadded) input, aligned to kept cols
        out = out + lax.slice_in_dim(x2d, r0, r0 + Lv, axis=1)
    o_ref[0] = out.astype(o_ref.dtype)


def _mbblock_kernel_expand(x_ref, im_ref, km_ref, we_ref, be_ref, wd_ref, bd_ref,
                           w1_ref, b1_ref, w2_ref, b2_ref, wp_ref, bp_ref, o_ref,
                           *, K, Wp, Lv, pad, inv_cnt, use_residual):
    _mbblock_body(x_ref[0].astype(jnp.float32), im_ref[...], km_ref[...],
                  (we_ref[...], be_ref[...]), wd_ref[...], bd_ref[...],
                  w1_ref[...], b1_ref[...], w2_ref[...], b2_ref[...],
                  wp_ref[...], bp_ref[...], o_ref,
                  K=K, Wp=Wp, Lv=Lv, pad=pad, inv_cnt=inv_cnt,
                  use_residual=use_residual)


def _mbblock_kernel_noexpand(x_ref, im_ref, km_ref, wd_ref, bd_ref,
                             w1_ref, b1_ref, w2_ref, b2_ref, wp_ref, bp_ref, o_ref,
                             *, K, Wp, Lv, pad, inv_cnt, use_residual):
    _mbblock_body(x_ref[0].astype(jnp.float32), im_ref[...], km_ref[...],
                  None, wd_ref[...], bd_ref[...],
                  w1_ref[...], b1_ref[...], w2_ref[...], b2_ref[...],
                  wp_ref[...], bp_ref[...], o_ref,
                  K=K, Wp=Wp, Lv=Lv, pad=pad, inv_cnt=inv_cnt,
                  use_residual=use_residual)


# ----------------------------- forward pass -----------------------------

def mbblock_forward(x_nchw, p, kernel_size, stride, padding):
    """Single fused Pallas kernel for the whole MBBlock (eval mode). NCHW in/out."""
    N, Cin, H, W = x_nchw.shape
    K, pad, s = kernel_size, padding, stride
    hidden, Cout, reduced = p["hidden"], p["out_ch"], p["reduced"]
    Hp, Wp = H + 2 * pad, W + 2 * pad
    L = Hp * Wp
    Ho = (H + 2 * pad - K) // s + 1
    Wo = (W + 2 * pad - K) // s + 1
    Lv = L - (K - 1) * (Wp + 1)                 # flat "valid" conv window length
    use_residual = (Cin == Cout) and s == 1
    expand = p["expand"]

    # Zero-pad the spatial halo and flatten H*W onto the lane axis (NCHW-native).
    xf = jnp.pad(x_nchw.astype(jnp.float32),
                 ((0, 0), (0, 0), (pad, pad), (pad, pad))).reshape(N, Cin, L)

    # Host-built constant masks (avoids in-kernel integer div/mod on the lane axis).
    ii, jj = jnp.arange(L) // Wp, jnp.arange(L) % Wp
    imask = (((ii >= pad) & (ii < pad + H) & (jj >= pad) & (jj < pad + W))
             .astype(jnp.float32).reshape(1, L))
    mi, mj = jnp.arange(Lv) // Wp, jnp.arange(Lv) % Wp
    kmask = (((mi % s == 0) & (mi // s < Ho) & (mj % s == 0) & (mj // s < Wo))
             .astype(jnp.float32).reshape(1, Lv))

    def fold_bn(w, b, bn):          # channel-first conv weight, eval-BN folded in
        gamma, beta, mean, var = bn
        sc = gamma / jnp.sqrt(var + EPS)
        wf = w * sc.reshape((-1,) + (1,) * (w.ndim - 1))
        bf = (b - mean) * sc + beta
        return wf.astype(jnp.float32), bf.reshape(-1, 1).astype(jnp.float32)

    wd_f, bd_f = fold_bn(p["wd"], p["bd"], p["bnd"])
    wd_f = wd_f.reshape(hidden, K * K)
    wp_f, bp_f = fold_bn(p["wp"], p["bp"], p["bnp"])
    w1, b1 = p["w1"], p["b1"].reshape(reduced, 1)
    w2, b2 = p["w2"], p["b2"].reshape(hidden, 1)

    cfg = dict(K=K, Wp=Wp, Lv=Lv, pad=pad, inv_cnt=1.0 / float(Ho * Wo),
               use_residual=use_residual)

    def const(shape):               # resident operand: constant block index
        return pl.BlockSpec(shape, lambda n, _r=len(shape): (0,) * _r)

    in_specs = [pl.BlockSpec((1, Cin, L), lambda n: (n, 0, 0)),
                const((1, L)), const((1, Lv))]
    operands = [xf, imask, kmask]
    if expand:
        we_f, be_f = fold_bn(p["we"], p["be"], p["bne"])
        in_specs += [const((hidden, Cin)), const((hidden, 1))]
        operands += [we_f, be_f]
        kernel = _mbblock_kernel_expand
    else:
        kernel = _mbblock_kernel_noexpand
    in_specs += [const((hidden, K * K)), const((hidden, 1)),
                 const((reduced, hidden)), const((reduced, 1)),
                 const((hidden, reduced)), const((hidden, 1)),
                 const((Cout, hidden)), const((Cout, 1))]
    operands += [wd_f, bd_f, w1, b1, w2, b2, wp_f, bp_f]

    out_flat = pl.pallas_call(
        functools.partial(kernel, **cfg),
        out_shape=jax.ShapeDtypeStruct((N, Cout, Lv), jnp.float32),
        grid=(N,),                              # one fused step per batch image
        in_specs=in_specs,
        out_specs=pl.BlockSpec((1, Cout, Lv), lambda n: (n, 0, 0)),
        compiler_params=pltpu.CompilerParams(
            dimension_semantics=("parallel",)),  # batch shards across megacore TCs
    )(*operands)

    # Un-flatten the valid window and pick the strided output positions
    # (cheap host-side view ops on the small final output only).
    out_grid = jnp.pad(out_flat, ((0, 0), (0, 0), (0, L - Lv))).reshape(N, Cout, Hp, Wp)
    return out_grid[:, :, :(Ho - 1) * s + 1:s, :(Wo - 1) * s + 1:s]


# ----------------------------- parameter setup -----------------------------

def init_mbblock_params(key, in_ch, out_ch, kernel_size, expand_ratio, reduction=2):
    hidden = in_ch * expand_ratio
    reduced = int(in_ch / reduction)
    ks = jax.random.split(key, 16)

    def nrm(k, shape, scale=0.1):
        return scale * jax.random.normal(k, shape, jnp.float32)

    def bn_params(k, c):
        k1, k2, k3, k4 = jax.random.split(k, 4)
        gamma = 1.0 + 0.1 * jax.random.normal(k1, (c,), jnp.float32)
        beta = 0.1 * jax.random.normal(k2, (c,), jnp.float32)
        mean = 0.1 * jax.random.normal(k3, (c,), jnp.float32)
        var = jax.random.uniform(k4, (c,), jnp.float32, 0.5, 1.5)
        return (gamma, beta, mean, var)

    return {
        "in_ch": in_ch, "out_ch": out_ch, "hidden": hidden, "reduced": reduced,
        "expand": in_ch != hidden,
        # expand 1x1 conv (hidden, Cin) + BN
        "we": nrm(ks[0], (hidden, in_ch)), "be": nrm(ks[1], (hidden,)),
        "bne": bn_params(ks[2], hidden),
        # depthwise KxK conv (hidden, K, K) + BN
        "wd": nrm(ks[3], (hidden, kernel_size, kernel_size)), "bd": nrm(ks[4], (hidden,)),
        "bnd": bn_params(ks[5], hidden),
        # squeeze-excitation 1x1 convs
        "w1": nrm(ks[6], (reduced, hidden)), "b1": nrm(ks[7], (reduced,)),
        "w2": nrm(ks[8], (hidden, reduced)), "b2": nrm(ks[9], (hidden,)),
        # pointwise 1x1 conv (out, hidden) + BN
        "wp": nrm(ks[10], (out_ch, hidden)), "bp": nrm(ks[11], (out_ch,)),
        "bnp": bn_params(ks[12], out_ch),
    }


# ----------------------------- pure-JAX reference -----------------------------

def mbblock_reference(x_nchw, p, kernel_size, stride, padding):
    """Pure-JAX reference (unfused BN), mirrors the PyTorch module in eval mode."""
    def bn(y, params):
        gamma, beta, mean, var = params
        rs = lambda a: a.reshape(1, -1, 1, 1)
        return (y - rs(mean)) / jnp.sqrt(rs(var) + EPS) * rs(gamma) + rs(beta)

    K, pad, s = kernel_size, padding, stride
    inputs = x_nchw.astype(jnp.float32)
    y = inputs
    if p["expand"]:
        y = jnp.einsum("dc,nchw->ndhw", p["we"], y) + p["be"].reshape(1, -1, 1, 1)
        y = _silu(bn(y, p["bne"]))
    wdw = p["wd"].reshape(p["hidden"], 1, K, K)
    y = lax.conv_general_dilated(
        y, wdw, window_strides=(s, s),
        padding=((pad, pad), (pad, pad)),
        dimension_numbers=("NCHW", "OIHW", "NCHW"),
        feature_group_count=p["hidden"]) + p["bd"].reshape(1, -1, 1, 1)
    y = _silu(bn(y, p["bnd"]))
    m = jnp.mean(y, axis=(2, 3))                                   # (N, hidden)
    h = _silu(jnp.einsum("rc,nc->nr", p["w1"], m) + p["b1"])
    se = jax.nn.sigmoid(jnp.einsum("cr,nr->nc", p["w2"], h) + p["b2"])
    y = y * se[:, :, None, None]
    y = jnp.einsum("dc,nchw->ndhw", p["wp"], y) + p["bp"].reshape(1, -1, 1, 1)
    y = bn(y, p["bnp"])
    if (p["in_ch"] == p["out_ch"]) and s == 1:
        y = y + inputs
    return y


# ----------------------------- main -----------------------------

if __name__ == "__main__":
    # MBBlock(in_channels=4, out_channels=4, kernel_size=3, stride=1, padding=1,
    #         expand_ratio=4)  -> hidden_dim=16, reduced_dim=2, use_residual=True
    # (eval mode: no stochastic-depth drop)
    N, C_IN, C_OUT, HW = 2, 4, 4, 16
    K, STRIDE, PAD, EXPAND = 3, 1, 1, 4

    key = jax.random.PRNGKey(0)
    kx, kp = jax.random.split(key)
    x = jax.random.normal(kx, (N, C_IN, HW, HW), jnp.float32)      # NCHW input
    params = init_mbblock_params(kp, C_IN, C_OUT, K, EXPAND, reduction=2)

    out = jax.block_until_ready(mbblock_forward(x, params, K, STRIDE, PAD))
    ref = jax.block_until_ready(mbblock_reference(x, params, K, STRIDE, PAD))

    assert out.shape == (N, C_OUT, HW, HW), out.shape
    max_err = float(jnp.max(jnp.abs(out - ref)))
    assert max_err < 1e-4, f"mismatch vs reference: {max_err}"
    print("KERNEL_OK")
</pallas_src>

<mosaic_0001>
module attributes {stable_mosaic.version = 11 : i64} {
  func.func @_mbblock_kernel_expand(%arg0: i32, %arg1: memref<1x4x324xf32, #tpu.memory_space<vmem>>, %arg2: memref<1x324xf32, #tpu.memory_space<vmem>>, %arg3: memref<1x286xf32, #tpu.memory_space<vmem>>, %arg4: memref<16x4xf32, #tpu.memory_space<vmem>>, %arg5: memref<16x1xf32, #tpu.memory_space<vmem>>, %arg6: memref<16x9xf32, #tpu.memory_space<vmem>>, %arg7: memref<16x1xf32, #tpu.memory_space<vmem>>, %arg8: memref<2x16xf32, #tpu.memory_space<vmem>>, %arg9: memref<2x1xf32, #tpu.memory_space<vmem>>, %arg10: memref<16x2xf32, #tpu.memory_space<vmem>>, %arg11: memref<16x1xf32, #tpu.memory_space<vmem>>, %arg12: memref<4x16xf32, #tpu.memory_space<vmem>>, %arg13: memref<4x1xf32, #tpu.memory_space<vmem>>, %arg14: memref<1x4x286xf32, #tpu.memory_space<vmem>>) attributes {dimension_semantics = [#tpu.dimension_semantics<parallel>], iteration_bounds = array<i64: 2>, scalar_prefetch = 0 : i64, scratch_operands = 0 : i64, tpu.core_type = #tpu.core_type<tc>, window_params = [{transform_indices = @transform_0, window_bounds = array<i64: 1, 4, 324>}, {pipeline_mode = #tpu.pipeline_mode<synchronous>, transform_indices = @transform_1, window_bounds = array<i64: 1, 324>}, {pipeline_mode = #tpu.pipeline_mode<synchronous>, transform_indices = @transform_2, window_bounds = array<i64: 1, 286>}, {pipeline_mode = #tpu.pipeline_mode<synchronous>, transform_indices = @transform_3, window_bounds = array<i64: 16, 4>}, {pipeline_mode = #tpu.pipeline_mode<synchronous>, transform_indices = @transform_4, window_bounds = array<i64: 16, 1>}, {pipeline_mode = #tpu.pipeline_mode<synchronous>, transform_indices = @transform_5, window_bounds = array<i64: 16, 9>}, {pipeline_mode = #tpu.pipeline_mode<synchronous>, transform_indices = @transform_6, window_bounds = array<i64: 16, 1>}, {pipeline_mode = #tpu.pipeline_mode<synchronous>, transform_indices = @transform_7, window_bounds = array<i64: 2, 16>}, {pipeline_mode = #tpu.pipeline_mode<synchronous>, transform_indices = @transform_8, window_bounds = array<i64: 2, 1>}, {pipeline_mode = #tpu.pipeline_mode<synchronous>, transform_indices = @transform_9, window_bounds = array<i64: 16, 2>}, {pipeline_mode = #tpu.pipeline_mode<synchronous>, transform_indices = @transform_10, window_bounds = array<i64: 16, 1>}, {pipeline_mode = #tpu.pipeline_mode<synchronous>, transform_indices = @transform_11, window_bounds = array<i64: 4, 16>}, {pipeline_mode = #tpu.pipeline_mode<synchronous>, transform_indices = @transform_12, window_bounds = array<i64: 4, 1>}, {transform_indices = @transform_13, window_bounds = array<i64: 1, 4, 286>}]} {
    %c0 = arith.constant 0 : index
    %c0_0 = arith.constant 0 : index
    %c0_1 = arith.constant 0 : index
    %0 = vector.load %arg1[%c0, %c0_0, %c0_1] : memref<1x4x324xf32, #tpu.memory_space<vmem>>, vector<1x4x324xf32>
    %1 = vector.shape_cast %0 : vector<1x4x324xf32> to vector<4x324xf32>
    %c0_2 = arith.constant 0 : index
    %c0_3 = arith.constant 0 : index
    %2 = vector.load %arg2[%c0_2, %c0_3] : memref<1x324xf32, #tpu.memory_space<vmem>>, vector<1x324xf32>
    %c0_4 = arith.constant 0 : index
    %c0_5 = arith.constant 0 : index
    %3 = vector.load %arg3[%c0_4, %c0_5] : memref<1x286xf32, #tpu.memory_space<vmem>>, vector<1x286xf32>
    %c0_6 = arith.constant 0 : index
    %c0_7 = arith.constant 0 : index
    %4 = vector.load %arg4[%c0_6, %c0_7] : memref<16x4xf32, #tpu.memory_space<vmem>>, vector<16x4xf32>
    %c0_8 = arith.constant 0 : index
    %c0_9 = arith.constant 0 : index
    %5 = vector.load %arg5[%c0_8, %c0_9] : memref<16x1xf32, #tpu.memory_space<vmem>>, vector<16x1xf32>
    %c0_10 = arith.constant 0 : index
    %c0_11 = arith.constant 0 : index
    %6 = vector.load %arg6[%c0_10, %c0_11] : memref<16x9xf32, #tpu.memory_space<vmem>>, vector<16x9xf32>
    %c0_12 = arith.constant 0 : index
    %c0_13 = arith.constant 0 : index
    %7 = vector.load %arg7[%c0_12, %c0_13] : memref<16x1xf32, #tpu.memory_space<vmem>>, vector<16x1xf32>
    %c0_14 = arith.constant 0 : index
    %c0_15 = arith.constant 0 : index
    %8 = vector.load %arg8[%c0_14, %c0_15] : memref<2x16xf32, #tpu.memory_space<vmem>>, vector<2x16xf32>
    %c0_16 = arith.constant 0 : index
    %c0_17 = arith.constant 0 : index
    %9 = vector.load %arg9[%c0_16, %c0_17] : memref<2x1xf32, #tpu.memory_space<vmem>>, vector<2x1xf32>
    %c0_18 = arith.constant 0 : index
    %c0_19 = arith.constant 0 : index
    %10 = vector.load %arg10[%c0_18, %c0_19] : memref<16x2xf32, #tpu.memory_space<vmem>>, vector<16x2xf32>
    %c0_20 = arith.constant 0 : index
    %c0_21 = arith.constant 0 : index
    %11 = vector.load %arg11[%c0_20, %c0_21] : memref<16x1xf32, #tpu.memory_space<vmem>>, vector<16x1xf32>
    %c0_22 = arith.constant 0 : index
    %c0_23 = arith.constant 0 : index
    %12 = vector.load %arg12[%c0_22, %c0_23] : memref<4x16xf32, #tpu.memory_space<vmem>>, vector<4x16xf32>
    %c0_24 = arith.constant 0 : index
    %c0_25 = arith.constant 0 : index
    %13 = vector.load %arg13[%c0_24, %c0_25] : memref<4x1xf32, #tpu.memory_space<vmem>>, vector<4x1xf32>
    %cst = arith.constant dense<0.000000e+00> : vector<16x324xf32>
    %14 = tpu.matmul %4, %1, %cst {dimension_numbers = #tpu.dot_dimension_numbers<[1], [0], [0], [1], [0, 0, 1, 1], [], []>} : vector<16x4xf32>, vector<4x324xf32>, vector<16x324xf32> -> vector<16x324xf32>
    %15 = vector.broadcast %5 : vector<16x1xf32> to vector<16x324xf32>
    %16 = arith.addf %14, %15 : vector<16x324xf32>
    %17 = arith.negf %16 : vector<16x324xf32>
    %18 = math.exp %17 : vector<16x324xf32>
    %cst_26 = arith.constant 1.000000e+00 : f32
    %19 = vector.broadcast %cst_26 : f32 to vector<16x324xf32>
    %20 = arith.addf %19, %18 : vector<16x324xf32>
    %21 = arith.divf %19, %20 : vector<16x324xf32>
    %22 = arith.mulf %16, %21 : vector<16x324xf32>
    %23 = vector.broadcast %2 : vector<1x324xf32> to vector<16x324xf32>
    %24 = arith.mulf %22, %23 : vector<16x324xf32>
    %cst_27 = arith.constant 0.000000e+00 : f32
    %25 = vector.broadcast %cst_27 : f32 to vector<16x286xf32>
    %26 = vector.extract_strided_slice %24 {offsets = [0, 0], sizes = [16, 286], strides = [1, 1]} : vector<16x324xf32> to vector<16x286xf32>
    %27 = vector.extract_strided_slice %6 {offsets = [0, 0], sizes = [16, 1], strides = [1, 1]} : vector<16x9xf32> to vector<16x1xf32>
    %28 = vector.broadcast %27 : vector<16x1xf32> to vector<16x286xf32>
    %29 = arith.mulf %26, %28 : vector<16x286xf32>
    %30 = arith.addf %25, %29 : vector<16x286xf32>
    %31 = vector.extract_strided_slice %24 {offsets = [0, 1], sizes = [16, 286], strides = [1, 1]} : vector<16x324xf32> to vector<16x286xf32>
    %32 = vector.extract_strided_slice %6 {offsets = [0, 1], sizes = [16, 1], strides = [1, 1]} : vector<16x9xf32> to vector<16x1xf32>
    %33 = vector.broadcast %32 : vector<16x1xf32> to vector<16x286xf32>
    %34 = arith.mulf %31, %33 : vector<16x286xf32>
    %35 = arith.addf %30, %34 : vector<16x286xf32>
    %36 = vector.extract_strided_slice %24 {offsets = [0, 2], sizes = [16, 286], strides = [1, 1]} : vector<16x324xf32> to vector<16x286xf32>
    %37 = vector.extract_strided_slice %6 {offsets = [0, 2], sizes = [16, 1], strides = [1, 1]} : vector<16x9xf32> to vector<16x1xf32>
    %38 = vector.broadcast %37 : vector<16x1xf32> to vector<16x286xf32>
    %39 = arith.mulf %36, %38 : vector<16x286xf32>
    %40 = arith.addf %35, %39 : vector<16x286xf32>
    %41 = vector.extract_strided_slice %24 {offsets = [0, 18], sizes = [16, 286], strides = [1, 1]} : vector<16x324xf32> to vector<16x286xf32>
    %42 = vector.extract_strided_slice %6 {offsets = [0, 3], sizes = [16, 1], strides = [1, 1]} : vector<16x9xf32> to vector<16x1xf32>
    %43 = vector.broadcast %42 : vector<16x1xf32> to vector<16x286xf32>
    %44 = arith.mulf %41, %43 : vector<16x286xf32>
    %45 = arith.addf %40, %44 : vector<16x286xf32>
    %46 = vector.extract_strided_slice %24 {offsets = [0, 19], sizes = [16, 286], strides = [1, 1]} : vector<16x324xf32> to vector<16x286xf32>
    %47 = vector.extract_strided_slice %6 {offsets = [0, 4], sizes = [16, 1], strides = [1, 1]} : vector<16x9xf32> to vector<16x1xf32>
    %48 = vector.broadcast %47 : vector<16x1xf32> to vector<16x286xf32>
    %49 = arith.mulf %46, %48 : vector<16x286xf32>
    %50 = arith.addf %45, %49 : vector<16x286xf32>
    %51 = vector.extract_strided_slice %24 {offsets = [0, 20], sizes = [16, 286], strides = [1, 1]} : vector<16x324xf32> to vector<16x286xf32>
    %52 = vector.extract_strided_slice %6 {offsets = [0, 5], sizes = [16, 1], strides = [1, 1]} : vector<16x9xf32> to vector<16x1xf32>
    %53 = vector.broadcast %52 : vector<16x1xf32> to vector<16x286xf32>
    %54 = arith.mulf %51, %53 : vector<16x286xf32>
    %55 = arith.addf %50, %54 : vector<16x286xf32>
    %56 = vector.extract_strided_slice %24 {offsets = [0, 36], sizes = [16, 286], strides = [1, 1]} : vector<16x324xf32> to vector<16x286xf32>
    %57 = vector.extract_strided_slice %6 {offsets = [0, 6], sizes = [16, 1], strides = [1, 1]} : vector<16x9xf32> to vector<16x1xf32>
    %58 = vector.broadcast %57 : vector<16x1xf32> to vector<16x286xf32>
    %59 = arith.mulf %56, %58 : vector<16x286xf32>
    %60 = arith.addf %55, %59 : vector<16x286xf32>
    %61 = vector.extract_strided_slice %24 {offsets = [0, 37], sizes = [16, 286], strides = [1, 1]} : vector<16x324xf32> to vector<16x286xf32>
    %62 = vector.extract_strided_slice %6 {offsets = [0, 7], sizes = [16, 1], strides = [1, 1]} : vector<16x9xf32> to vector<16x1xf32>
    %63 = vector.broadcast %62 : vector<16x1xf32> to vector<16x286xf32>
    %64 = arith.mulf %61, %63 : vector<16x286xf32>
    %65 = arith.addf %60, %64 : vector<16x286xf32>
    %66 = vector.extract_strided_slice %24 {offsets = [0, 38], sizes = [16, 286], strides = [1, 1]} : vector<16x324xf32> to vector<16x286xf32>
    %67 = vector.extract_strided_slice %6 {offsets = [0, 8], sizes = [16, 1], strides = [1, 1]} : vector<16x9xf32> to vector<16x1xf32>
    %68 = vector.broadcast %67 : vector<16x1xf32> to vector<16x286xf32>
    %69 = arith.mulf %66, %68 : vector<16x286xf32>
    %70 = arith.addf %65, %69 : vector<16x286xf32>
    %71 = vector.broadcast %7 : vector<16x1xf32> to vector<16x286xf32>
    %72 = arith.addf %70, %71 : vector<16x286xf32>
    %73 = arith.negf %72 : vector<16x286xf32>
    %74 = math.exp %73 : vector<16x286xf32>
    %cst_28 = arith.constant 1.000000e+00 : f32
    %75 = vector.broadcast %cst_28 : f32 to vector<16x286xf32>
    %76 = arith.addf %75, %74 : vector<16x286xf32>
    %77 = arith.divf %75, %76 : vector<16x286xf32>
    %78 = arith.mulf %72, %77 : vector<16x286xf32>
    %79 = vector.broadcast %3 : vector<1x286xf32> to vector<16x286xf32>
    %80 = arith.mulf %78, %79 : vector<16x286xf32>
    %cst_29 = arith.constant dense<0.000000e+00> : vector<16xf32>
    %81 = vector.multi_reduction <add>, %80, %cst_29 [1] : vector<16x286xf32> to vector<16xf32>
    %82 = vector.shape_cast %81 : vector<16xf32> to vector<16x1xf32>
    %cst_30 = arith.constant 3.906250e-03 : f32
    %83 = vector.broadcast %cst_30 : f32 to vector<16x1xf32>
    %84 = arith.mulf %82, %83 : vector<16x1xf32>
    %cst_31 = arith.constant dense<0.000000e+00> : vector<2x1xf32>
    %85 = tpu.matmul %8, %84, %cst_31 {dimension_numbers = #tpu.dot_dimension_numbers<[1], [0], [0], [1], [0, 0, 1, 1], [], []>} : vector<2x16xf32>, vector<16x1xf32>, vector<2x1xf32> -> vector<2x1xf32>
    %86 = arith.addf %85, %9 : vector<2x1xf32>
    %87 = arith.negf %86 : vector<2x1xf32>
    %88 = math.exp %87 : vector<2x1xf32>
    %cst_32 = arith.constant 1.000000e+00 : f32
    %89 = vector.broadcast %cst_32 : f32 to vector<2x1xf32>
    %90 = arith.addf %89, %88 : vector<2x1xf32>
    %91 = arith.divf %89, %90 : vector<2x1xf32>
    %92 = arith.mulf %86, %91 : vector<2x1xf32>
    %cst_33 = arith.constant dense<0.000000e+00> : vector<16x1xf32>
    %93 = tpu.matmul %10, %92, %cst_33 {dimension_numbers = #tpu.dot_dimension_numbers<[1], [0], [0], [1], [0, 0, 1, 1], [], []>} : vector<16x2xf32>, vector<2x1xf32>, vector<16x1xf32> -> vector<16x1xf32>
    %94 = arith.addf %93, %11 : vector<16x1xf32>
    %95 = arith.negf %94 : vector<16x1xf32>
    %96 = math.exp %95 : vector<16x1xf32>
    %cst_34 = arith.constant 1.000000e+00 : f32
    %97 = vector.broadcast %cst_34 : f32 to vector<16x1xf32>
    %98 = arith.addf %97, %96 : vector<16x1xf32>
    %99 = arith.divf %97, %98 : vector<16x1xf32>
    %100 = vector.broadcast %99 : vector<16x1xf32> to vector<16x286xf32>
    %101 = arith.mulf %78, %100 : vector<16x286xf32>
    %cst_35 = arith.constant dense<0.000000e+00> : vector<4x286xf32>
    %102 = tpu.matmul %12, %101, %cst_35 {dimension_numbers = #tpu.dot_dimension_numbers<[1], [0], [0], [1], [0, 0, 1, 1], [], []>} : vector<4x16xf32>, vector<16x286xf32>, vector<4x286xf32> -> vector<4x286xf32>
    %103 = vector.broadcast %13 : vector<4x1xf32> to vector<4x286xf32>
    %104 = arith.addf %102, %103 : vector<4x286xf32>
    %105 = vector.extract_strided_slice %1 {offsets = [0, 19], sizes = [4, 286], strides = [1, 1]} : vector<4x324xf32> to vector<4x286xf32>
    %106 = arith.addf %104, %105 : vector<4x286xf32>
    %c0_36 = arith.constant 0 : index
    %c0_37 = arith.constant 0 : index
    %c0_38 = arith.constant 0 : index
    %107 = vector.load %arg14[%c0_36, %c0_37, %c0_38] : memref<1x4x286xf32, #tpu.memory_space<vmem>>, vector<1x4x286xf32>
    %108 = vector.shape_cast %107 : vector<1x4x286xf32> to vector<4x286xf32>
    %109 = vector.shape_cast %106 : vector<4x286xf32> to vector<1x4x286xf32>
    tpu.vector_store %arg14[%c0_36, %c0_37, %c0_38], %109 {strides = array<i32>} : memref<1x4x286xf32, #tpu.memory_space<vmem>>, vector<1x4x286xf32>,
    return
  }
  func.func @transform_0(%arg0: i32) -> (i32, i32, i32) {
    %c0_i32 = arith.constant 0 : i32
    %c0_i32_0 = arith.constant 0 : i32
    %c0_i32_1 = arith.constant 0 : i32
    return %arg0, %c0_i32, %c0_i32_0 : i32, i32, i32
  }
  func.func @transform_1(%arg0: i32) -> (i32, i32) {
    %c0_i32 = arith.constant 0 : i32
    %c0_i32_0 = arith.constant 0 : i32
    %c0_i32_1 = arith.constant 0 : i32
    return %c0_i32, %c0_i32_0 : i32, i32
  }
  func.func @transform_2(%arg0: i32) -> (i32, i32) {
    %c0_i32 = arith.constant 0 : i32
    %c0_i32_0 = arith.constant 0 : i32
    %c0_i32_1 = arith.constant 0 : i32
    return %c0_i32, %c0_i32_0 : i32, i32
  }
  func.func @transform_3(%arg0: i32) -> (i32, i32) {
    %c0_i32 = arith.constant 0 : i32
    %c0_i32_0 = arith.constant 0 : i32
    %c0_i32_1 = arith.constant 0 : i32
    return %c0_i32, %c0_i32_0 : i32, i32
  }
  func.func @transform_4(%arg0: i32) -> (i32, i32) {
    %c0_i32 = arith.constant 0 : i32
    %c0_i32_0 = arith.constant 0 : i32
    %c0_i32_1 = arith.constant 0 : i32
    return %c0_i32, %c0_i32_0 : i32, i32
  }
  func.func @transform_5(%arg0: i32) -> (i32, i32) {
    %c0_i32 = arith.constant 0 : i32
    %c0_i32_0 = arith.constant 0 : i32
    %c0_i32_1 = arith.constant 0 : i32
    return %c0_i32, %c0_i32_0 : i32, i32
  }
  func.func @transform_6(%arg0: i32) -> (i32, i32) {
    %c0_i32 = arith.constant 0 : i32
    %c0_i32_0 = arith.constant 0 : i32
    %c0_i32_1 = arith.constant 0 : i32
    return %c0_i32, %c0_i32_0 : i32, i32
  }
  func.func @transform_7(%arg0: i32) -> (i32, i32) {
    %c0_i32 = arith.constant 0 : i32
    %c0_i32_0 = arith.constant 0 : i32
    %c0_i32_1 = arith.constant 0 : i32
    return %c0_i32, %c0_i32_0 : i32, i32
  }
  func.func @transform_8(%arg0: i32) -> (i32, i32) {
    %c0_i32 = arith.constant 0 : i32
    %c0_i32_0 = arith.constant 0 : i32
    %c0_i32_1 = arith.constant 0 : i32
    return %c0_i32, %c0_i32_0 : i32, i32
  }
  func.func @transform_9(%arg0: i32) -> (i32, i32) {
    %c0_i32 = arith.constant 0 : i32
    %c0_i32_0 = arith.constant 0 : i32
    %c0_i32_1 = arith.constant 0 : i32
    return %c0_i32, %c0_i32_0 : i32, i32
  }
  func.func @transform_10(%arg0: i32) -> (i32, i32) {
    %c0_i32 = arith.constant 0 : i32
    %c0_i32_0 = arith.constant 0 : i32
    %c0_i32_1 = arith.constant 0 : i32
    return %c0_i32, %c0_i32_0 : i32, i32
  }
  func.func @transform_11(%arg0: i32) -> (i32, i32) {
    %c0_i32 = arith.constant 0 : i32
    %c0_i32_0 = arith.constant 0 : i32
    %c0_i32_1 = arith.constant 0 : i32
    return %c0_i32, %c0_i32_0 : i32, i32
  }
  func.func @transform_12(%arg0: i32) -> (i32, i32) {
    %c0_i32 = arith.constant 0 : i32
    %c0_i32_0 = arith.constant 0 : i32
    %c0_i32_1 = arith.constant 0 : i32
    return %c0_i32, %c0_i32_0 : i32, i32
  }
  func.func @transform_13(%arg0: i32) -> (i32, i32, i32) {
    %c0_i32 = arith.constant 0 : i32
    %c0_i32_0 = arith.constant 0 : i32
    %c0_i32_1 = arith.constant 0 : i32
    return %arg0, %c0_i32, %c0_i32_0 : i32, i32, i32
  }
}

</mosaic_0001>

<llo_original>
// kernel: tpu_custom_call.1
$region0: #{tpu_custom_call.1}
  #allocation0 [shape = 'u32[]', space=smem, size = 0x4, offset = 0x4, fixed_abs, tag = 'smem constant byte address 0x4 - core index']
  #allocation1 [shape = 'u32[144,128]{1,0:T(1,128)}', space=vmem, size = 0x12000, scoped, tag = 'internal scratch']
  %s0 = inlined_call_operand.vmem [shape: f32[2,4,324], index: 0, kind: input, shape index: {}]
  %s1 = inlined_call_operand.vmem [shape: f32[1,324], index: 1, kind: input, shape index: {}]
  %s2 = inlined_call_operand.vmem [shape: f32[1,286], index: 2, kind: input, shape index: {}]
  %s3 = inlined_call_operand.vmem [shape: f32[16,4], index: 3, kind: input, shape index: {}]
  %s4 = inlined_call_operand.vmem [shape: f32[16,1], index: 4, kind: input, shape index: {}]
  %s5 = inlined_call_operand.vmem [shape: f32[16,9], index: 5, kind: input, shape index: {}]
  %s6 = inlined_call_operand.vmem [shape: f32[16,1], index: 6, kind: input, shape index: {}]
  %s7 = inlined_call_operand.vmem [shape: f32[2,16], index: 7, kind: input, shape index: {}]
  %s8 = inlined_call_operand.vmem [shape: f32[2,1], index: 8, kind: input, shape index: {}]
  %s9 = inlined_call_operand.vmem [shape: f32[16,2], index: 9, kind: input, shape index: {}]
  %s10 = inlined_call_operand.vmem [shape: f32[16,1], index: 10, kind: input, shape index: {}]
  %s11 = inlined_call_operand.vmem [shape: f32[4,16], index: 11, kind: input, shape index: {}]
  %s12 = inlined_call_operand.vmem [shape: f32[4,1], index: 12, kind: input, shape index: {}]
  %s13 = inlined_call_operand.hbm [shape: f32[2,4,286], index: 13, kind: output, shape index: {}]
  %s14 = sld [smem:[#allocation0]]
  $region85: #{tpu_custom_call.1} parent=0
    _
  %s16 = ssub.s32 1, %s14
  %s17 = scalar_select 0, %s16, %s14
  $region1: #{tpu_custom_call.1} parent=0
    #allocation2 [shape = 'u8[12288]{0}', space=vmem, size = 0x3000, scoped, tag = 'output window, operand 0']
    #allocation3 [shape = 's32[2]{0}', space=sflag, size = 0x8, scoped, tag = 'scoped memory for tpu_custom_call.1']
    %18 = vsyncpa [#allocation3], 0
    %s19 = scalar_lea.sflag [#allocation3], 1
    %20 = vsyncpa %s19, 0
    loop: start=0, step=1, limit=4
    $region2: #{tpu_custom_call.1} parent=1 // loop_pre_header
      _
    $region3: #{tpu_custom_call.1} parent=1 // loop_header
      %s22 = sphi 0, %s26
      %p23 = scmp.ge.s32.totalorder %s22, 4
      %s32 = sphi 0, %s34
      %s35 = sphi 0, %s32
      %s36 = sphi 0, %s35
      %s52 = sphi 0, %s36
      %s56 = sphi 0, %s56
      %s58 = sphi 0, %s56
      %s59 = sphi 0, %s58
      %s73 = sphi 0, %s59
      %s77 = sphi 0, %s77
      %s79 = sphi 0, %s77
      %s80 = sphi 0, %s79
      %s94 = sphi 0, %s80
      %s98 = sphi 0, %s98
      %s100 = sphi 0, %s98
      %s101 = sphi 0, %s100
      %s115 = sphi 0, %s101
      %s119 = sphi 0, %s119
      %s121 = sphi 0, %s119
      %s122 = sphi 0, %s121
      %s136 = sphi 0, %s122
      %s140 = sphi 0, %s140
      %s142 = sphi 0, %s140
      %s143 = sphi 0, %s142
      %s157 = sphi 0, %s143
      %s161 = sphi 0, %s161
      %s163 = sphi 0, %s161
      %s164 = sphi 0, %s163
      %s178 = sphi 0, %s164
      %s182 = sphi 0, %s182
      %s184 = sphi 0, %s182
      %s185 = sphi 0, %s184
      %s199 = sphi 0, %s185
      %s203 = sphi 0, %s203
      %s205 = sphi 0, %s203
      %s206 = sphi 0, %s205
      %s220 = sphi 0, %s206
      %s224 = sphi 0, %s224
      %s226 = sphi 0, %s224
      %s227 = sphi 0, %s226
      %s241 = sphi 0, %s227
      %s245 = sphi 0, %s245
      %s247 = sphi 0, %s245
      %s248 = sphi 0, %s247
      %s262 = sphi 0, %s248
      %s266 = sphi 0, %s266
      %s268 = sphi 0, %s266
      %s269 = sphi 0, %s268
      %s283 = sphi 0, %s269
      %s287 = sphi 0, %s287
      %s289 = sphi 0, %s287
      %s290 = sphi 0, %s289
      %s304 = sphi 0, %s290
      %s310 = sphi 0, %s312
      %s313 = sphi 0, %s310
      %s314 = sphi 0, %s313
      %s330 = sphi 0, %s314
    $region4: #{tpu_custom_call.1} parent=1 // loop_header_branch
      %25 = sbr.rel (%p23) target = $region8
    $region5: #{tpu_custom_call.1} parent=1 // loop_body
      %s27 = ssub.s32 %s22, 1
      %s28 = ssub.s32 %s22, 2
      %s29 = sadd.s32 %s22, 1
      %s30 = ssub.s32 %s22, %s29
      %p31 = scmp.eq.s32.totalorder %s30, 0
      %s33 = sadd.s32 %s32, 1
      %s34 = scalar_select %p31, %s32, %s33
      %p37 = pneg %p31
      %p38 = scmp.eq.s32.totalorder %s22, 1
      %p39 = por %p37, %p38
      %p40 = scmp.ne.s32.totalorder %s32, %s35
      %p41 = scmp.eq.s32.totalorder %s22, 0
      %p42 = por %p40, %p41
      %p43 = scmp.ne.s32.totalorder %s32, %s35
      %p44 = scmp.eq.s32.totalorder %s27, 1
      %p45 = por %p43, %p44
      %p46 = scmp.ne.s32.totalorder %s35, %s36
      %p47 = scmp.eq.s32.totalorder %s27, 0
      %p48 = por %p46, %p47
      %p49 = scmp.ne.s32.totalorder %s35, %s36
      %p50 = scmp.eq.s32.totalorder %s28, 1
      %p51 = por %p49, %p50
      %p53 = scmp.ne.s32.totalorder %s36, %s52
      %p54 = scmp.eq.s32.totalorder %s28, 0
      %p55 = por %p53, %p54
      %s57 = sadd.s32 %s56, 1
      %p60 = scmp.eq.s32.totalorder %s22, 1
      %p61 = scmp.ne.s32.totalorder %s56, %s58
      %p62 = scmp.eq.s32.totalorder %s22, 0
      %p63 = por %p61, %p62
      %p64 = scmp.ne.s32.totalorder %s56, %s58
      %p65 = scmp.eq.s32.totalorder %s27, 1
      %p66 = por %p64, %p65
      %p67 = scmp.ne.s32.totalorder %s58, %s59
      %p68 = scmp.eq.s32.totalorder %s27, 0
      %p69 = por %p67, %p68
      %p70 = scmp.ne.s32.totalorder %s58, %s59
      %p71 = scmp.eq.s32.totalorder %s28, 1
      %p72 = por %p70, %p71
      %p74 = scmp.ne.s32.totalorder %s59, %s73
      %p75 = scmp.eq.s32.totalorder %s28, 0
      %p76 = por %p74, %p75
      %s78 = sadd.s32 %s77, 1
      %p81 = scmp.eq.s32.totalorder %s22, 1
      %p82 = scmp.ne.s32.totalorder %s77, %s79
      %p83 = scmp.eq.s32.totalorder %s22, 0
      %p84 = por %p82, %p83
      %p85 = scmp.ne.s32.totalorder %s77, %s79
      %p86 = scmp.eq.s32.totalorder %s27, 1
      %p87 = por %p85, %p86
      %p88 = scmp.ne.s32.totalorder %s79, %s80
      %p89 = scmp.eq.s32.totalorder %s27, 0
      %p90 = por %p88, %p89
      %p91 = scmp.ne.s32.totalorder %s79, %s80
      %p92 = scmp.eq.s32.totalorder %s28, 1
      %p93 = por %p91, %p92
      %p95 = scmp.ne.s32.totalorder %s80, %s94
      %p96 = scmp.eq.s32.totalorder %s28, 0
      %p97 = por %p95, %p96
      %s99 = sadd.s32 %s98, 1
      %p102 = scmp.eq.s32.totalorder %s22, 1
      %p103 = scmp.ne.s32.totalorder %s98, %s100
      %p104 = scmp.eq.s32.totalorder %s22, 0
      %p105 = por %p103, %p104
      %p106 = scmp.ne.s32.totalorder %s98, %s100
      %p107 = scmp.eq.s32.totalorder %s27, 1
      %p108 = por %p106, %p107
      %p109 = scmp.ne.s32.totalorder %s100, %s101
      %p110 = scmp.eq.s32.totalorder %s27, 0
      %p111 = por %p109, %p110
      %p112 = scmp.ne.s32.totalorder %s100, %s101
      %p113 = scmp.eq.s32.totalorder %s28, 1
      %p114 = por %p112, %p113
      %p116 = scmp.ne.s32.totalorder %s101, %s115
      %p117 = scmp.eq.s32.totalorder %s28, 0
      %p118 = por %p116, %p117
      %s120 = sadd.s32 %s119, 1
      %p123 = scmp.eq.s32.totalorder %s22, 1
      %p124 = scmp.ne.s32.totalorder %s119, %s121
      %p125 = scmp.eq.s32.totalorder %s22, 0
      %p126 = por %p124, %p125
      %p127 = scmp.ne.s32.totalorder %s119, %s121
      %p128 = scmp.eq.s32.totalorder %s27, 1
      %p129 = por %p127, %p128
      %p130 = scmp.ne.s32.totalorder %s121, %s122
      %p131 = scmp.eq.s32.totalorder %s27, 0
      %p132 = por %p130, %p131
      %p133 = scmp.ne.s32.totalorder %s121, %s122
      %p134 = scmp.eq.s32.totalorder %s28, 1
      %p135 = por %p133, %p134
      %p137 = scmp.ne.s32.totalorder %s122, %s136
      %p138 = scmp.eq.s32.totalorder %s28, 0
      %p139 = por %p137, %p138
      %s141 = sadd.s32 %s140, 1
      %p144 = scmp.eq.s32.totalorder %s22, 1
      %p145 = scmp.ne.s32.totalorder %s140, %s142
      %p146 = scmp.eq.s32.totalorder %s22, 0
      %p147 = por %p145, %p146
      %p148 = scmp.ne.s32.totalorder %s140, %s142
      %p149 = scmp.eq.s32.totalorder %s27, 1
      %p150 = por %p148, %p149
      %p151 = scmp.ne.s32.totalorder %s142, %s143
      %p152 = scmp.eq.s32.totalorder %s27, 0
      %p153 = por %p151, %p152
      %p154 = scmp.ne.s32.totalorder %s142, %s143
      %p155 = scmp.eq.s32.totalorder %s28, 1
      %p156 = por %p154, %p155
      %p158 = scmp.ne.s32.totalorder %s143, %s157
      %p159 = scmp.eq.s32.totalorder %s28, 0
      %p160 = por %p158, %p159
      %s162 = sadd.s32 %s161, 1
      %p165 = scmp.eq.s32.totalorder %s22, 1
      %p166 = scmp.ne.s32.totalorder %s161, %s163
      %p167 = scmp.eq.s32.totalorder %s22, 0
      %p168 = por %p166, %p167
      %p169 = scmp.ne.s32.totalorder %s161, %s163
      %p170 = scmp.eq.s32.totalorder %s27, 1
      %p171 = por %p169, %p170
      %p172 = scmp.ne.s32.totalorder %s163, %s164
      %p173 = scmp.eq.s32.totalorder %s27, 0
      %p174 = por %p172, %p173
      %p175 = scmp.ne.s32.totalorder %s163, %s164
      %p176 = scmp.eq.s32.totalorder %s28, 1
      %p177 = por %p175, %p176
      %p179 = scmp.ne.s32.totalorder %s164, %s178
      %p180 = scmp.eq.s32.totalorder %s28, 0
      %p181 = por %p179, %p180
      %s183 = sadd.s32 %s182, 1
      %p186 = scmp.eq.s32.totalorder %s22, 1
      %p187 = scmp.ne.s32.totalorder %s182, %s184
      %p188 = scmp.eq.s32.totalorder %s22, 0
      %p189 = por %p187, %p188
      %p190 = scmp.ne.s32.totalorder %s182, %s184
      %p191 = scmp.eq.s32.totalorder %s27, 1
      %p192 = por %p190, %p191
      %p193 = scmp.ne.s32.totalorder %s184, %s185
      %p194 = scmp.eq.s32.totalorder %s27, 0
      %p195 = por %p193, %p194
      %p196 = scmp.ne.s32.totalorder %s184, %s185
      %p197 = scmp.eq.s32.totalorder %s28, 1
      %p198 = por %p196, %p197
      %p200 = scmp.ne.s32.totalorder %s185, %s199
      %p201 = scmp.eq.s32.totalorder %s28, 0
      %p202 = por %p200, %p201
      %s204 = sadd.s32 %s203, 1
      %p207 = scmp.eq.s32.totalorder %s22, 1
      %p208 = scmp.ne.s32.totalorder %s203, %s205
      %p209 = scmp.eq.s32.totalorder %s22, 0
      %p210 = por %p208, %p209
      %p211 = scmp.ne.s32.totalorder %s203, %s205
      %p212 = scmp.eq.s32.totalorder %s27, 1
      %p213 = por %p211, %p212
      %p214 = scmp.ne.s32.totalorder %s205, %s206
      %p215 = scmp.eq.s32.totalorder %s27, 0
      %p216 = por %p214, %p215
      %p217 = scmp.ne.s32.totalorder %s205, %s206
      %p218 = scmp.eq.s32.totalorder %s28, 1
      %p219 = por %p217, %p218
      %p221 = scmp.ne.s32.totalorder %s206, %s220
      %p222 = scmp.eq.s32.totalorder %s28, 0
      %p223 = por %p221, %p222
      %s225 = sadd.s32 %s224, 1
      %p228 = scmp.eq.s32.totalorder %s22, 1
      %p229 = scmp.ne.s32.totalorder %s224, %s226
      %p230 = scmp.eq.s32.totalorder %s22, 0
      %p231 = por %p229, %p230
      %p232 = scmp.ne.s32.totalorder %s224, %s226
      %p233 = scmp.eq.s32.totalorder %s27, 1
      %p234 = por %p232, %p233
      %p235 = scmp.ne.s32.totalorder %s226, %s227
      %p236 = scmp.eq.s32.totalorder %s27, 0
      %p237 = por %p235, %p236
      %p238 = scmp.ne.s32.totalorder %s226, %s227
      %p239 = scmp.eq.s32.totalorder %s28, 1
      %p240 = por %p238, %p239
      %p242 = scmp.ne.s32.totalorder %s227, %s241
      %p243 = scmp.eq.s32.totalorder %s28, 0
      %p244 = por %p242, %p243
      %s246 = sadd.s32 %s245, 1
      %p249 = scmp.eq.s32.totalorder %s22, 1
      %p250 = scmp.ne.s32.totalorder %s245, %s247
      %p251 = scmp.eq.s32.totalorder %s22, 0
      %p252 = por %p250, %p251
      %p253 = scmp.ne.s32.totalorder %s245, %s247
      %p254 = scmp.eq.s32.totalorder %s27, 1
      %p255 = por %p253, %p254
      %p256 = scmp.ne.s32.totalorder %s247, %s248
      %p257 = scmp.eq.s32.totalorder %s27, 0
      %p258 = por %p256, %p257
      %p259 = scmp.ne.s32.totalorder %s247, %s248
      %p260 = scmp.eq.s32.totalorder %s28, 1
      %p261 = por %p259, %p260
      %p263 = scmp.ne.s32.totalorder %s248, %s262
      %p264 = scmp.eq.s32.totalorder %s28, 0
      %p265 = por %p263, %p264
      %s267 = sadd.s32 %s266, 1
      %p270 = scmp.eq.s32.totalorder %s22, 1
      %p271 = scmp.ne.s32.totalorder %s266, %s268
      %p272 = scmp.eq.s32.totalorder %s22, 0
      %p273 = por %p271, %p272
      %p274 = scmp.ne.s32.totalorder %s266, %s268
      %p275 = scmp.eq.s32.totalorder %s27, 1
      %p276 = por %p274, %p275
      %p277 = scmp.ne.s32.totalorder %s268, %s269
      %p278 = scmp.eq.s32.totalorder %s27, 0
      %p279 = por %p277, %p278
      %p280 = scmp.ne.s32.totalorder %s268, %s269
      %p281 = scmp.eq.s32.totalorder %s28, 1
      %p282 = por %p280, %p281
      %p284 = scmp.ne.s32.totalorder %s269, %s283
      %p285 = scmp.eq.s32.totalorder %s28, 0
      %p286 = por %p284, %p285
      %s288 = sadd.s32 %s287, 1
      %p291 = scmp.eq.s32.totalorder %s22, 1
      %p292 = scmp.ne.s32.totalorder %s287, %s289
      %p293 = scmp.eq.s32.totalorder %s22, 0
      %p294 = por %p292, %p293
      %p295 = scmp.ne.s32.totalorder %s287, %s289
      %p296 = scmp.eq.s32.totalorder %s27, 1
      %p297 = por %p295, %p296
      %p298 = scmp.ne.s32.totalorder %s289, %s290
      %p299 = scmp.eq.s32.totalorder %s27, 0
      %p300 = por %p298, %p299
      %p301 = scmp.ne.s32.totalorder %s289, %s290
      %p302 = scmp.eq.s32.totalorder %s28, 1
      %p303 = por %p301, %p302
      %p305 = scmp.ne.s32.totalorder %s290, %s304
      %p306 = scmp.eq.s32.totalorder %s28, 0
      %p307 = por %p305, %p306
      %s308 = ssub.s32 %s22, %s29
      %p309 = scmp.eq.s32.totalorder %s308, 0
      %s311 = sadd.s32 %s310, 1
      %s312 = scalar_select %p309, %s310, %s311
      %p315 = pneg %p309
      %p316 = scmp.eq.s32.totalorder %s22, 1
      %p317 = por %p315, %p316
      %p318 = scmp.ne.s32.totalorder %s310, %s313
      %p319 = scmp.eq.s32.totalorder %s22, 0
      %p320 = por %p318, %p319
      %p321 = scmp.ne.s32.totalorder %s310, %s313
      %p322 = scmp.eq.s32.totalorder %s27, 1
      %p323 = por %p321, %p322
      %p324 = scmp.ne.s32.totalorder %s313, %s314
      %p325 = scmp.eq.s32.totalorder %s27, 0
      %p326 = por %p324, %p325
      %p327 = scmp.ne.s32.totalorder %s313, %s314
      %p328 = scmp.eq.s32.totalorder %s28, 1
      %p329 = por %p327, %p328
      %p331 = scmp.ne.s32.totalorder %s314, %s330
      %p332 = scmp.eq.s32.totalorder %s28, 0
      %p333 = por %p331, %p332
      %p334 = scmp.le.s32.totalorder 1, %s22
      %p335 = scmp.lt.s32.totalorder %s22, 3
      %p336 = pnand %p334, %p335
      %p337 = pneg %p336
      // Predicated region
      $region9: #{tpu_custom_call.1} parent=5 // pred_check
        _
      $region10: #{tpu_custom_call.1} parent=5 // pred_check_branch
        %339 = sbr.rel (%p336) target = $region12
      $region11: #{tpu_custom_call.1} parent=5 // pred_region
        %s340 = ssub.s32 %s22, 1
        // Predicated region
        $region13: #{tpu_custom_call.1} parent=11 // pred_check
          %p341 = pneg %p69
        $region14: #{tpu_custom_call.1} parent=11 // pred_check_branch
          %343 = sbr.rel (%p341) target = $region16
        $region15: #{tpu_custom_call.1} parent=11 // pred_region
          _
        $region16: #{tpu_custom_call.1} parent=11 // pred_fallthru
          _
        // Predicated region
        $region17: #{tpu_custom_call.1} parent=11 // pred_check
          %p344 = pneg %p90
        $region18: #{tpu_custom_call.1} parent=11 // pred_check_branch
          %346 = sbr.rel (%p344) target = $region20
        $region19: #{tpu_custom_call.1} parent=11 // pred_region
          _
        $region20: #{tpu_custom_call.1} parent=11 // pred_fallthru
          _
        // Predicated region
        $region21: #{tpu_custom_call.1} parent=11 // pred_check
          %p347 = pneg %p111
        $region22: #{tpu_custom_call.1} parent=11 // pred_check_branch
          %349 = sbr.rel (%p347) target = $region24
        $region23: #{tpu_custom_call.1} parent=11 // pred_region
          _
        $region24: #{tpu_custom_call.1} parent=11 // pred_fallthru
          _
        // Predicated region
        $region25: #{tpu_custom_call.1} parent=11 // pred_check
          %p350 = pneg %p132
        $region26: #{tpu_custom_call.1} parent=11 // pred_check_branch
          %352 = sbr.rel (%p350) target = $region28
        $region27: #{tpu_custom_call.1} parent=11 // pred_region
          _
        $region28: #{tpu_custom_call.1} parent=11 // pred_fallthru
          _
        // Predicated region
        $region29: #{tpu_custom_call.1} parent=11 // pred_check
          %p353 = pneg %p153
        $region30: #{tpu_custom_call.1} parent=11 // pred_check_branch
          %355 = sbr.rel (%p353) target = $region32
        $region31: #{tpu_custom_call.1} parent=11 // pred_region
          _
        $region32: #{tpu_custom_call.1} parent=11 // pred_fallthru
          _
        // Predicated region
        $region33: #{tpu_custom_call.1} parent=11 // pred_check
          %p356 = pneg %p174
        $region34: #{tpu_custom_call.1} parent=11 // pred_check_branch
          %358 = sbr.rel (%p356) target = $region36
        $region35: #{tpu_custom_call.1} parent=11 // pred_region
          _
        $region36: #{tpu_custom_call.1} parent=11 // pred_fallthru
          _
        // Predicated region
        $region37: #{tpu_custom_call.1} parent=11 // pred_check
          %p359 = pneg %p195
        $region38: #{tpu_custom_call.1} parent=11 // pred_check_branch
          %361 = sbr.rel (%p359) target = $region40
        $region39: #{tpu_custom_call.1} parent=11 // pred_region
          _
        $region40: #{tpu_custom_call.1} parent=11 // pred_fallthru
          _
        // Predicated region
        $region41: #{tpu_custom_call.1} parent=11 // pred_check
          %p362 = pneg %p216
        $region42: #{tpu_custom_call.1} parent=11 // pred_check_branch
          %364 = sbr.rel (%p362) target = $region44
        $region43: #{tpu_custom_call.1} parent=11 // pred_region
          _
        $region44: #{tpu_custom_call.1} parent=11 // pred_fallthru
          _
        // Predicated region
        $region45: #{tpu_custom_call.1} parent=11 // pred_check
          %p365 = pneg %p237
        $region46: #{tpu_custom_call.1} parent=11 // pred_check_branch
          %367 = sbr.rel (%p365) target = $region48
        $region47: #{tpu_custom_call.1} parent=11 // pred_region
          _
        $region48: #{tpu_custom_call.1} parent=11 // pred_fallthru
          _
        // Predicated region
        $region49: #{tpu_custom_call.1} parent=11 // pred_check
          %p368 = pneg %p258
        $region50: #{tpu_custom_call.1} parent=11 // pred_check_branch
          %370 = sbr.rel (%p368) target = $region52
        $region51: #{tpu_custom_call.1} parent=11 // pred_region
          _
        $region52: #{tpu_custom_call.1} parent=11 // pred_fallthru
          _
        // Predicated region
        $region53: #{tpu_custom_call.1} parent=11 // pred_check
          %p371 = pneg %p279
        $region54: #{tpu_custom_call.1} parent=11 // pred_check_branch
          %373 = sbr.rel (%p371) target = $region56
        $region55: #{tpu_custom_call.1} parent=11 // pred_region
          _
        $region56: #{tpu_custom_call.1} parent=11 // pred_fallthru
          _
        // Predicated region
        $region57: #{tpu_custom_call.1} parent=11 // pred_check
          %p374 = pneg %p300
        $region58: #{tpu_custom_call.1} parent=11 // pred_check_branch
          %376 = sbr.rel (%p374) target = $region60
        $region59: #{tpu_custom_call.1} parent=11 // pred_region
          _
        $region60: #{tpu_custom_call.1} parent=11 // pred_fallthru
          _
      $region12: #{tpu_custom_call.1} parent=5 // pred_fallthru
        _
      %p377 = scmp.lt.s32.totalorder %s22, 2
      // Predicated region
      $region61: #{tpu_custom_call.1} parent=5 // pred_check
        %p378 = pneg %p377
      $region62: #{tpu_custom_call.1} parent=5 // pred_check_branch
        %380 = sbr.rel (%p378) target = $region64
      $region63: #{tpu_custom_call.1} parent=5 // pred_region
        // Predicated region
        $region65: #{tpu_custom_call.1} parent=63 // pred_check
          %p381 = pneg %p42
        $region66: #{tpu_custom_call.1} parent=63 // pred_check_branch
          %383 = sbr.rel (%p381) target = $region68
        $region67: #{tpu_custom_call.1} parent=63 // pred_region
          %p384 = scmp.lt.s32.totalorder %s22, 1
          %s385 = scalar_select %p384, %s22, 1
          %s386 = smul.addr %s385, 3
          %s387 = smul.addr %s386, 4
          %s388 = scalar_lea.vmem %s0, %s387
        $region68: #{tpu_custom_call.1} parent=63 // pred_fallthru
          _
      $region64: #{tpu_custom_call.1} parent=5 // pred_fallthru
        _
      %p389 = scmp.le.s32.totalorder 1, %s22
      %p390 = scmp.lt.s32.totalorder %s22, 3
      %p391 = pnand %p389, %p390
      %p392 = pneg %p391
      // Predicated region
      $region69: #{tpu_custom_call.1} parent=5 // pred_check
        _
      $region70: #{tpu_custom_call.1} parent=5 // pred_check_branch
        %394 = sbr.rel (%p391) target = $region72
      $region71: #{tpu_custom_call.1} parent=5 // pred_region
        %s395 = ssub.s32 %s22, 1
        %p396 = scmp.lt.s32.totalorder %s27, 1
        %s397 = scalar_select %p396, %s27, 1
        %s398 = smul.addr %s397, 3
        %s399 = smul.addr %s398, 4
        %s400 = scalar_lea.vmem %s0, %s399
        %p401 = pneg %p48
        %p402 = pneg %p45
        %p403 = pneg %p69
        %p404 = pneg %p66
        %p405 = pneg %p90
        %p406 = pneg %p87
        %p407 = pneg %p111
        %p408 = pneg %p108
        %p409 = pneg %p132
        %p410 = pneg %p129
        %p411 = pneg %p153
        %p412 = pneg %p150
        %p413 = pneg %p174
        %p414 = pneg %p171
        %p415 = pneg %p195
        %p416 = pneg %p192
        %p417 = pneg %p216
        %p418 = pneg %p213
        %p419 = pneg %p237
        %p420 = pneg %p234
        %p421 = pneg %p258
        %p422 = pneg %p255
        %p423 = pneg %p279
        %p424 = pneg %p276
        %p425 = pneg %p300
        %p426 = pneg %p297
        %p427 = pneg %p326
        %p428 = pneg %p323
        %s429 = sand.u32 %s313, 1
        %s430 = scalar_lea.sflag [#allocation3], %s429
        %s431 = sand.u32 %s313, 1
        %s432 = smul.addr %s431, 12
        %s433 = scalar_lea.vmem [#allocation2], %s432
        %p434 = scmp.lt.s32.totalorder %s27, 1
        %s435 = scalar_select %p434, %s27, 1
        %s436 = smul.addr %s435, 3
        %s437 = smul.addr %s436, 4
        %s438 = scalar_lea.vmem %s0, %s437
        %v439 = vld [vmem:[%s438] sm:$0xff]
        %v440 = vld [vmem:[%s438 + $0x8] sm:$0xf]
        %v441 = vld [vmem:[%s1] sm:$0x7]
        %v442 = vld [vmem:[%s2] sm:$0x7]
        %v443 = vld [vmem:[%s3] sm:$0xff]
        %v444 = vld [vmem:[%s3 + $0x8] sm:$0xff]
        %v445 = vld [vmem:[%s4] sm:$0xff]
        %v446 = vld [vmem:[%s4 + $0x8] sm:$0xff]
        %v447 = vld [vmem:[%s5] sm:$0xff]
        %v448 = vld [vmem:[%s5 + $0x8] sm:$0xff]
        %v449 = vld [vmem:[%s6] sm:$0xff]
        %v450 = vld [vmem:[%s6 + $0x8] sm:$0xff]
        %v451 = vld [vmem:[%s7] sm:$0x3]
        %v452 = vld [vmem:[%s8] sm:$0x3]
        %v453 = vld [vmem:[%s9] sm:$0xff]
        %v454 = vld [vmem:[%s9 + $0x8] sm:$0xff]
        %v455 = vld [vmem:[%s10] sm:$0xff]
        %v456 = vld [vmem:[%s10 + $0x8] sm:$0xff]
        %v457 = vld [vmem:[%s11] sm:$0xf]
        %v458 = vld [vmem:[%s12] sm:$0xf]
        %460 = vset.pattern.permute.xlu0 0
        %461 = vperm.xlu0 %460, %v445
        %v462 = vpop.permute.xlu0 %461
        %465 = vset.pattern.permute.xlu0 0
        %466 = vperm.xlu0 %465, %v446
        %v467 = vpop.permute.xlu0 %466
        %v471 = vcombine.high %v439, %v439
        %vm472 = vcmask 31744
        %v474 = vsel %vm472, %v443, 0
        %v477 = vsel %vm472, %v444, 0
        %vm479 = vcmask 1043456
        %v480 = vsel %vm479, %v439, 0
        %v482 = vsel %vm479, %v471, 0
        %v484 = vsel %vm479, %v440, 0
        %486 = vmatprep.subr.mxu0 %v482
        %487 = vmatpush1.msra.mxu0 %v480
        %488 = vmatprep.subr.mxu0 0.0
        %489 = vmatpush1.msra.mxu0 0.0
        %490 = vmatprep.subr.mxu0 0.0
        %491 = vmatpush1.msra.mxu0 0.0
        %492 = vmatprep.subr.mxu0 0.0
        %493 = vmatpush1.msra.mxu0 0.0
        %494 = vmatprep.subr.mxu0 0.0
        %495 = vmatpush1.msra.mxu0 0.0
        %496 = vmatprep.subr.mxu0 0.0
        %497 = vmatpush1.msra.mxu0 0.0
        %498 = vmatprep.subr.mxu0 0.0
        %499 = vmatpush1.msra.mxu0 0.0
        %500 = vmatprep.subr.mxu0 0.0
        %501 = vmatpush1.msra.mxu0 0.0
        %502 = vmatprep.subr.mxu0 0.0
        %503 = vmatpush1.msra.mxu0 0.0
        %504 = vmatprep.subr.mxu0 0.0
        %505 = vmatpush1.msra.mxu0 0.0
        %506 = vmatprep.subr.mxu0 0.0
        %507 = vmatpush1.msra.mxu0 0.0
        %508 = vmatprep.subr.mxu0 0.0
        %509 = vmatpush1.msra.mxu0 0.0
        %510 = vmatprep.subr.mxu0 0.0
        %511 = vmatpush1.msra.mxu0 0.0
        %512 = vmatprep.subr.mxu0 0.0
        %513 = vmatpush1.msra.mxu0 0.0
        %514 = vmatprep.subr.mxu0 0.0
        %515 = vmatpush1.msra.mxu0 0.0
        %516 = vmatprep.subr.mxu0 0.0
        %517 = vmatpush1.msra.mxu0 0.0
        %518 = vmatprep.subr.mxu0 0.0
        %519 = vmatpush1.msra.mxu0 0.0
        %520 = vmatprep.subr.mxu0 0.0
        %521 = vmatpush1.msra.mxu0 0.0
        %522 = vmatprep.subr.mxu0 0.0
        %523 = vmatpush1.msra.mxu0 0.0
        %524 = vmatprep.subr.mxu0 0.0
        %525 = vmatpush1.msra.mxu0 0.0
        %526 = vmatprep.subr.mxu0 0.0
        %527 = vmatpush1.msra.mxu0 0.0
        %528 = vmatprep.subr.mxu0 0.0
        %529 = vmatpush1.msra.mxu0 0.0
        %530 = vmatprep.subr.mxu0 0.0
        %531 = vmatpush1.msra.mxu0 0.0
        %532 = vmatprep.subr.mxu0 0.0
        %533 = vmatpush1.msra.mxu0 0.0
        %534 = vmatprep.subr.mxu0 0.0
        %535 = vmatpush1.msra.mxu0 0.0
        %536 = vmatprep.subr.mxu0 0.0
        %537 = vmatpush1.msra.mxu0 0.0
        %538 = vmatprep.subr.mxu0 0.0
        %539 = vmatpush1.msra.mxu0 0.0
        %540 = vmatprep.subr.mxu0 0.0
        %541 = vmatpush1.msra.mxu0 0.0
        %542 = vmatprep.subr.mxu0 0.0
        %543 = vmatpush1.msra.mxu0 0.0
        %544 = vmatprep.subr.mxu0 0.0
        %545 = vmatpush1.msra.mxu0 0.0
        %546 = vmatprep.subr.mxu0 0.0
        %547 = vmatpush1.msra.mxu0 0.0
        %548 = vmatprep.subr.mxu0 0.0
        %549 = vmatpush1.msra.mxu0 0.0
        %550 = vmatprep.mubr.f32.mxu0 0.0
        %551 = vmatmul.mubr.f32.gmra.mrb[0].mxu0 %v474
        %v552 = vpop.f32.mrb[0].mxu0
        %v553 = vadd.f32 %v462, %v552
        %v554 = vpop.f32.mrb[0].mxu0
        %v555 = vadd.f32 %v462, %v554
        %556 = vmatprep.mubr.f32.mxu0 0.0
        %557 = vmatmul.mubr.f32.gmra.mrb[0].mxu0 %v477
        %v558 = vpop.f32.mrb[0].mxu0
        %v559 = vadd.f32 %v467, %v558
        %v560 = vpop.f32.mrb[0].mxu0
        %v561 = vadd.f32 %v467, %v560
        %562 = vdwg.mxu0
        %563 = vmatprep.subr.mxu0 0.0
        %564 = vmatpush1.msra.mxu0 %v484
        %565 = vmatprep.subr.mxu0 0.0
        %566 = vmatpush1.msra.mxu0 0.0
        %567 = vmatprep.subr.mxu0 0.0
        %568 = vmatpush1.msra.mxu0 0.0
        %569 = vmatprep.subr.mxu0 0.0
        %570 = vmatpush1.msra.mxu0 0.0
        %571 = vmatprep.subr.mxu0 0.0
        %572 = vmatpush1.msra.mxu0 0.0
        %573 = vmatprep.subr.mxu0 0.0
        %574 = vmatpush1.msra.mxu0 0.0
        %575 = vmatprep.subr.mxu0 0.0
        %576 = vmatpush1.msra.mxu0 0.0
        %577 = vmatprep.subr.mxu0 0.0
        %578 = vmatpush1.msra.mxu0 0.0
        %579 = vmatprep.subr.mxu0 0.0
        %580 = vmatpush1.msra.mxu0 0.0
        %581 = vmatprep.subr.mxu0 0.0
        %582 = vmatpush1.msra.mxu0 0.0
        %583 = vmatprep.subr.mxu0 0.0
        %584 = vmatpush1.msra.mxu0 0.0
        %585 = vmatprep.subr.mxu0 0.0
        %586 = vmatpush1.msra.mxu0 0.0
        %587 = vmatprep.subr.mxu0 0.0
        %588 = vmatpush1.msra.mxu0 0.0
        %589 = vmatprep.subr.mxu0 0.0
        %590 = vmatpush1.msra.mxu0 0.0
        %591 = vmatprep.subr.mxu0 0.0
        %592 = vmatpush1.msra.mxu0 0.0
        %593 = vmatprep.subr.mxu0 0.0
        %594 = vmatpush1.msra.mxu0 0.0
        %595 = vmatprep.subr.mxu0 0.0
        %596 = vmatpush1.msra.mxu0 0.0
        %597 = vmatprep.subr.mxu0 0.0
        %598 = vmatpush1.msra.mxu0 0.0
        %599 = vmatprep.subr.mxu0 0.0
        %600 = vmatpush1.msra.mxu0 0.0
        %601 = vmatprep.subr.mxu0 0.0
        %602 = vmatpush1.msra.mxu0 0.0
        %603 = vmatprep.subr.mxu0 0.0
        %604 = vmatpush1.msra.mxu0 0.0
        %605 = vmatprep.subr.mxu0 0.0
        %606 = vmatpush1.msra.mxu0 0.0
        %607 = vmatprep.subr.mxu0 0.0
        %608 = vmatpush1.msra.mxu0 0.0
        %609 = vmatprep.subr.mxu0 0.0
        %610 = vmatpush1.msra.mxu0 0.0
        %611 = vmatprep.subr.mxu0 0.0
        %612 = vmatpush1.msra.mxu0 0.0
        %613 = vmatprep.subr.mxu0 0.0
        %614 = vmatpush1.msra.mxu0 0.0
        %615 = vmatprep.subr.mxu0 0.0
        %616 = vmatpush1.msra.mxu0 0.0
        %617 = vmatprep.subr.mxu0 0.0
        %618 = vmatpush1.msra.mxu0 0.0
        %619 = vmatprep.subr.mxu0 0.0
        %620 = vmatpush1.msra.mxu0 0.0
        %621 = vmatprep.subr.mxu0 0.0
        %622 = vmatpush1.msra.mxu0 0.0
        %623 = vmatprep.subr.mxu0 0.0
        %624 = vmatpush1.msra.mxu0 0.0
        %625 = vmatprep.subr.mxu0 0.0
        %626 = vmatpush1.msra.mxu0 0.0
        %627 = vmatprep.mubr.f32.mxu0 0.0
        %628 = vmatmul.mubr.f32.gmra.mrb[0].mxu0 %v474
        %v629 = vpop.f32.mrb[0].mxu0
        %v630 = vadd.f32 %v462, %v629
        %v631 = vpop.f32.mrb[0].mxu0
        %632 = vmatprep.mubr.f32.mxu0 0.0
        %633 = vmatmul.mubr.f32.gmra.mrb[0].mxu0 %v477
        %v634 = vpop.f32.mrb[0].mxu0
        %v635 = vadd.f32 %v467, %v634
        %v636 = vpop.f32.mrb[0].mxu0
        %637 = vdwg.mxu0
        %v638 = vxor.u32 %v553, 2147483648
        %v639 = vxor.u32 %v555, 2147483648
        %v640 = vxor.u32 %v630, 2147483648
        %v641 = vxor.u32 %v559, 2147483648
        %v642 = vxor.u32 %v561, 2147483648
        %v643 = vxor.u32 %v635, 2147483648
        %v644 = vmul.f32 %v638, 1.442695
        %v645 = vpow.pop %v644
        %v646 = vmul.f32 %v639, 1.442695
        %v647 = vpow.pop %v646
        %v648 = vmul.f32 %v640, 1.442695
        %v649 = vpow.pop %v648
        %v650 = vmul.f32 %v641, 1.442695
        %v651 = vpow.pop %v650
        %v652 = vmul.f32 %v642, 1.442695
        %v653 = vpow.pop %v652
        %v654 = vmul.f32 %v643, 1.442695
        %v655 = vpow.pop %v654
        %v656 = vadd.f32 %v645, 1.0
        %v657 = vadd.f32 %v647, 1.0
        %v658 = vadd.f32 %v649, 1.0
        %v659 = vadd.f32 %v651, 1.0
        %v660 = vadd.f32 %v653, 1.0
        %v661 = vadd.f32 %v655, 1.0
        %v662 = vrcp.pop %v656
        %v663 = vmul.f32 1.0, %v662
        %v664 = vrcp.pop %v657
        %v665 = vmul.f32 1.0, %v664
        %v666 = vrcp.pop %v658
        %v667 = vmul.f32 1.0, %v666
        %v668 = vrcp.pop %v659
        %v669 = vmul.f32 1.0, %v668
        %v670 = vrcp.pop %v660
        %v671 = vmul.f32 1.0, %v670
        %v672 = vrcp.pop %v661
        %v673 = vmul.f32 1.0, %v672
        %v674 = vmul.f32 %v553, %v663
        %v675 = vmul.f32 %v555, %v665
        %v676 = vmul.f32 %v630, %v667
        %v677 = vmul.f32 %v559, %v669
        %v678 = vmul.f32 %v561, %v671
        %v679 = vmul.f32 %v635, %v673
        %v681 = vlaneseq
        %v682 = vshrl.u32 %v681, 7
        %v683 = vsub.s32 0, %v682
        %v684 = vrot.slane %v441, %v683
        %v685 = vlaneseq
        %v686 = vshrl.u32 %v685, 7
        %v687 = vsub.s32 1, %v686
        %v688 = vrot.slane %v441, %v687
        %v689 = vlaneseq
        %v690 = vshrl.u32 %v689, 7
        %v691 = vsub.s32 2, %v690
        %v692 = vrot.slane %v441, %v691
        %v696 = vmul.f32 %v674, %v684
        %v697 = vmul.f32 %v675, %v688
        %v698 = vmul.f32 %v676, %v692
        %v699 = vmul.f32 %v677, %v684
        %v700 = vmul.f32 %v678, %v688
        %v701 = vmul.f32 %v679, %v692
        %703 = vset.pattern.permute.xlu0 0
        %704 = vperm.xlu0 %703, %v447
        %v705 = vpop.permute.xlu0 %704
        %708 = vset.pattern.permute.xlu0 0
        %709 = vperm.xlu0 %708, %v448
        %v710 = vpop.permute.xlu0 %709
        %v712 = vmul.f32 %v696, %v705
        %v713 = vmul.f32 %v697, %v705
        %v714 = vmul.f32 %v698, %v705
        %v715 = vmul.f32 %v699, %v710
        %v716 = vmul.f32 %v700, %v710
        %v717 = vmul.f32 %v701, %v710
        %v718 = vadd.f32 %v712, 0.0
        %v719 = vadd.f32 %v713, 0.0
        %v720 = vadd.f32 %v714, 0.0
        %v721 = vadd.f32 %v715, 0.0
        %v722 = vadd.f32 %v716, 0.0
        %v723 = vadd.f32 %v717, 0.0
        %724 = vset.pattern.permute.xlu0 1
        %725 = vperm.xlu0 %724, %v447
        %v726 = vpop.permute.xlu0 %725
        %728 = vset.pattern.permute.xlu0 1
        %729 = vperm.xlu0 %728, %v448
        %v730 = vpop.permute.xlu0 %729
        %v732 = vmul.f32 %v696, %v726
        %v733 = vmul.f32 %v697, %v726
        %v734 = vmul.f32 %v698, %v726
        %v735 = vmul.f32 %v699, %v730
        %v736 = vmul.f32 %v700, %v730
        %v737 = vmul.f32 %v701, %v730
        %744 = vrot.lane.b32.xlu0 %v732, 127
        %v745 = vpop.permute.xlu0 %744
        %746 = vrot.lane.b32.xlu0 %v733, 127
        %v747 = vpop.permute.xlu0 %746
        %748 = vrot.lane.b32.xlu0 %v734, 127
        %v749 = vpop.permute.xlu0 %748
        %750 = vrot.lane.b32.xlu0 %v735, 127
        %v751 = vpop.permute.xlu0 %750
        %752 = vrot.lane.b32.xlu0 %v736, 127
        %v753 = vpop.permute.xlu0 %752
        %754 = vrot.lane.b32.xlu0 %v737, 127
        %v755 = vpop.permute.xlu0 %754
        %vm756 = vcmask 1039360
        %v757 = vsel %vm756, %v745, %v747
        %v758 = vsel %vm756, %v747, %v749
        %v759 = vsel %vm756, %v751, %v753
        %v760 = vsel %vm756, %v753, %v755
        %v767 = vadd.f32 %v718, %v757
        %v768 = vadd.f32 %v719, %v758
        %v769 = vadd.f32 %v720, %v749
        %v770 = vadd.f32 %v721, %v759
        %v771 = vadd.f32 %v722, %v760
        %v772 = vadd.f32 %v723, %v755
        %773 = vset.pattern.permute.xlu0 2
        %774 = vperm.xlu0 %773, %v447
        %v775 = vpop.permute.xlu0 %774
        %777 = vset.pattern.permute.xlu0 2
        %778 = vperm.xlu0 %777, %v448
        %v779 = vpop.permute.xlu0 %778
        %v781 = vmul.f32 %v696, %v775
        %v782 = vmul.f32 %v697, %v775
        %v783 = vmul.f32 %v698, %v775
        %v784 = vmul.f32 %v699, %v779
        %v785 = vmul.f32 %v700, %v779
        %v786 = vmul.f32 %v701, %v779
        %793 = vrot.lane.b32.xlu0 %v781, 126
        %v794 = vpop.permute.xlu0 %793
        %795 = vrot.lane.b32.xlu0 %v782, 126
        %v796 = vpop.permute.xlu0 %795
        %797 = vrot.lane.b32.xlu0 %v783, 126
        %v798 = vpop.permute.xlu0 %797
        %799 = vrot.lane.b32.xlu0 %v784, 126
        %v800 = vpop.permute.xlu0 %799
        %801 = vrot.lane.b32.xlu0 %v785, 126
        %v802 = vpop.permute.xlu0 %801
        %803 = vrot.lane.b32.xlu0 %v786, 126
        %v804 = vpop.permute.xlu0 %803
        %vm805 = vcmask 1031168
        %v806 = vsel %vm805, %v794, %v796
        %v807 = vsel %vm805, %v796, %v798
        %v808 = vsel %vm805, %v800, %v802
        %v809 = vsel %vm805, %v802, %v804
        %v816 = vadd.f32 %v767, %v806
        %v817 = vadd.f32 %v768, %v807
        %v818 = vadd.f32 %v769, %v798
        %v819 = vadd.f32 %v770, %v808
        %v820 = vadd.f32 %v771, %v809
        %v821 = vadd.f32 %v772, %v804
        %822 = vset.pattern.permute.xlu0 3
        %823 = vperm.xlu0 %822, %v447
        %v824 = vpop.permute.xlu0 %823
        %826 = vset.pattern.permute.xlu0 3
        %827 = vperm.xlu0 %826, %v448
        %v828 = vpop.permute.xlu0 %827
        %v830 = vmul.f32 %v696, %v824
        %v831 = vmul.f32 %v697, %v824
        %v832 = vmul.f32 %v698, %v824
        %v833 = vmul.f32 %v699, %v828
        %v834 = vmul.f32 %v700, %v828
        %v835 = vmul.f32 %v701, %v828
        %842 = vrot.lane.b32.xlu0 %v830, 110
        %v843 = vpop.permute.xlu0 %842
        %844 = vrot.lane.b32.xlu0 %v831, 110
        %v845 = vpop.permute.xlu0 %844
        %846 = vrot.lane.b32.xlu0 %v832, 110
        %v847 = vpop.permute.xlu0 %846
        %848 = vrot.lane.b32.xlu0 %v833, 110
        %v849 = vpop.permute.xlu0 %848
        %850 = vrot.lane.b32.xlu0 %v834, 110
        %v851 = vpop.permute.xlu0 %850
        %852 = vrot.lane.b32.xlu0 %v835, 110
        %v853 = vpop.permute.xlu0 %852
        %vm854 = vcmask 900096
        %v855 = vsel %vm854, %v843, %v845
        %v856 = vsel %vm854, %v845, %v847
        %v857 = vsel %vm854, %v849, %v851
        %v858 = vsel %vm854, %v851, %v853
        %v865 = vadd.f32 %v816, %v855
        %v866 = vadd.f32 %v817, %v856
        %v867 = vadd.f32 %v818, %v847
        %v868 = vadd.f32 %v819, %v857
        %v869 = vadd.f32 %v820, %v858
        %v870 = vadd.f32 %v821, %v853
        %871 = vset.pattern.permute.xlu0 4
        %872 = vperm.xlu0 %871, %v447
        %v873 = vpop.permute.xlu0 %872
        %875 = vset.pattern.permute.xlu0 4
        %876 = vperm.xlu0 %875, %v448
        %v877 = vpop.permute.xlu0 %876
        %v879 = vmul.f32 %v696, %v873
        %v880 = vmul.f32 %v697, %v873
        %v881 = vmul.f32 %v698, %v873
        %v882 = vmul.f32 %v699, %v877
        %v883 = vmul.f32 %v700, %v877
        %v884 = vmul.f32 %v701, %v877
        %891 = vrot.lane.b32.xlu0 %v879, 109
        %v892 = vpop.permute.xlu0 %891
        %893 = vrot.lane.b32.xlu0 %v880, 109
        %v894 = vpop.permute.xlu0 %893
        %895 = vrot.lane.b32.xlu0 %v881, 109
        %v896 = vpop.permute.xlu0 %895
        %897 = vrot.lane.b32.xlu0 %v882, 109
        %v898 = vpop.permute.xlu0 %897
        %899 = vrot.lane.b32.xlu0 %v883, 109
        %v900 = vpop.permute.xlu0 %899
        %901 = vrot.lane.b32.xlu0 %v884, 109
        %v902 = vpop.permute.xlu0 %901
        %vm903 = vcmask 891904
        %v904 = vsel %vm903, %v892, %v894
        %v905 = vsel %vm903, %v894, %v896
        %v906 = vsel %vm903, %v898, %v900
        %v907 = vsel %vm903, %v900, %v902
        %v914 = vadd.f32 %v865, %v904
        %v915 = vadd.f32 %v866, %v905
        %v916 = vadd.f32 %v867, %v896
        %v917 = vadd.f32 %v868, %v906
        %v918 = vadd.f32 %v869, %v907
        %v919 = vadd.f32 %v870, %v902
        %920 = vset.pattern.permute.xlu0 5
        %921 = vperm.xlu0 %920, %v447
        %v922 = vpop.permute.xlu0 %921
        %924 = vset.pattern.permute.xlu0 5
        %925 = vperm.xlu0 %924, %v448
        %v926 = vpop.permute.xlu0 %925
        %v928 = vmul.f32 %v696, %v922
        %v929 = vmul.f32 %v697, %v922
        %v930 = vmul.f32 %v698, %v922
        %v931 = vmul.f32 %v699, %v926
        %v932 = vmul.f32 %v700, %v926
        %v933 = vmul.f32 %v701, %v926
        %940 = vrot.lane.b32.xlu0 %v928, 108
        %v941 = vpop.permute.xlu0 %940
        %942 = vrot.lane.b32.xlu0 %v929, 108
        %v943 = vpop.permute.xlu0 %942
        %944 = vrot.lane.b32.xlu0 %v930, 108
        %v945 = vpop.permute.xlu0 %944
        %946 = vrot.lane.b32.xlu0 %v931, 108
        %v947 = vpop.permute.xlu0 %946
        %948 = vrot.lane.b32.xlu0 %v932, 108
        %v949 = vpop.permute.xlu0 %948
        %950 = vrot.lane.b32.xlu0 %v933, 108
        %v951 = vpop.permute.xlu0 %950
        %vm952 = vcmask 883712
        %v953 = vsel %vm952, %v941, %v943
        %v954 = vsel %vm952, %v943, %v945
        %v955 = vsel %vm952, %v947, %v949
        %v956 = vsel %vm952, %v949, %v951
        %v963 = vadd.f32 %v914, %v953
        %v964 = vadd.f32 %v915, %v954
        %v965 = vadd.f32 %v916, %v945
        %v966 = vadd.f32 %v917, %v955
        %v967 = vadd.f32 %v918, %v956
        %v968 = vadd.f32 %v919, %v951
        %969 = vset.pattern.permute.xlu0 6
        %970 = vperm.xlu0 %969, %v447
        %v971 = vpop.permute.xlu0 %970
        %973 = vset.pattern.permute.xlu0 6
        %974 = vperm.xlu0 %973, %v448
        %v975 = vpop.permute.xlu0 %974
        %v977 = vmul.f32 %v696, %v971
        %v978 = vmul.f32 %v697, %v971
        %v979 = vmul.f32 %v698, %v971
        %v980 = vmul.f32 %v699, %v975
        %v981 = vmul.f32 %v700, %v975
        %v982 = vmul.f32 %v701, %v975
        %989 = vrot.lane.b32.xlu0 %v977, 92
        %v990 = vpop.permute.xlu0 %989
        %991 = vrot.lane.b32.xlu0 %v978, 92
        %v992 = vpop.permute.xlu0 %991
        %993 = vrot.lane.b32.xlu0 %v979, 92
        %v994 = vpop.permute.xlu0 %993
        %995 = vrot.lane.b32.xlu0 %v980, 92
        %v996 = vpop.permute.xlu0 %995
        %997 = vrot.lane.b32.xlu0 %v981, 92
        %v998 = vpop.permute.xlu0 %997
        %999 = vrot.lane.b32.xlu0 %v982, 92
        %v1000 = vpop.permute.xlu0 %999
        %vm1001 = vcmask 752640
        %v1002 = vsel %vm1001, %v990, %v992
        %v1003 = vsel %vm1001, %v992, %v994
        %v1004 = vsel %vm1001, %v996, %v998
        %v1005 = vsel %vm1001, %v998, %v1000
        %v1012 = vadd.f32 %v963, %v1002
        %v1013 = vadd.f32 %v964, %v1003
        %v1014 = vadd.f32 %v965, %v994
        %v1015 = vadd.f32 %v966, %v1004
        %v1016 = vadd.f32 %v967, %v1005
        %v1017 = vadd.f32 %v968, %v1000
        %1018 = vset.pattern.permute.xlu0 7
        %1019 = vperm.xlu0 %1018, %v447
        %v1020 = vpop.permute.xlu0 %1019
        %1022 = vset.pattern.permute.xlu0 7
        %1023 = vperm.xlu0 %1022, %v448
        %v1024 = vpop.permute.xlu0 %1023
        %v1026 = vmul.f32 %v696, %v1020
        %v1027 = vmul.f32 %v697, %v1020
        %v1028 = vmul.f32 %v698, %v1020
        %v1029 = vmul.f32 %v699, %v1024
        %v1030 = vmul.f32 %v700, %v1024
        %v1031 = vmul.f32 %v701, %v1024
        %1038 = vrot.lane.b32.xlu0 %v1026, 91
        %v1039 = vpop.permute.xlu0 %1038
        %1040 = vrot.lane.b32.xlu0 %v1027, 91
        %v1041 = vpop.permute.xlu0 %1040
        %1042 = vrot.lane.b32.xlu0 %v1028, 91
        %v1043 = vpop.permute.xlu0 %1042
        %1044 = vrot.lane.b32.xlu0 %v1029, 91
        %v1045 = vpop.permute.xlu0 %1044
        %1046 = vrot.lane.b32.xlu0 %v1030, 91
        %v1047 = vpop.permute.xlu0 %1046
        %1048 = vrot.lane.b32.xlu0 %v1031, 91
        %v1049 = vpop.permute.xlu0 %1048
        %vm1050 = vcmask 744448
        %v1051 = vsel %vm1050, %v1039, %v1041
        %v1052 = vsel %vm1050, %v1041, %v1043
        %v1053 = vsel %vm1050, %v1045, %v1047
        %v1054 = vsel %vm1050, %v1047, %v1049
        %v1061 = vadd.f32 %v1012, %v1051
        %v1062 = vadd.f32 %v1013, %v1052
        %v1063 = vadd.f32 %v1014, %v1043
        %v1064 = vadd.f32 %v1015, %v1053
        %v1065 = vadd.f32 %v1016, %v1054
        %v1066 = vadd.f32 %v1017, %v1049
        %1067 = vset.pattern.permute.xlu0 8
        %1068 = vperm.xlu0 %1067, %v447
        %v1069 = vpop.permute.xlu0 %1068
        %1071 = vset.pattern.permute.xlu0 8
        %1072 = vperm.xlu0 %1071, %v448
        %v1073 = vpop.permute.xlu0 %1072
        %v1075 = vmul.f32 %v696, %v1069
        %v1076 = vmul.f32 %v697, %v1069
        %v1077 = vmul.f32 %v698, %v1069
        %v1078 = vmul.f32 %v699, %v1073
        %v1079 = vmul.f32 %v700, %v1073
        %v1080 = vmul.f32 %v701, %v1073
        %1087 = vrot.lane.b32.xlu0 %v1075, 90
        %v1088 = vpop.permute.xlu0 %1087
        %1089 = vrot.lane.b32.xlu0 %v1076, 90
        %v1090 = vpop.permute.xlu0 %1089
        %1091 = vrot.lane.b32.xlu0 %v1077, 90
        %v1092 = vpop.permute.xlu0 %1091
        %1093 = vrot.lane.b32.xlu0 %v1078, 90
        %v1094 = vpop.permute.xlu0 %1093
        %1095 = vrot.lane.b32.xlu0 %v1079, 90
        %v1096 = vpop.permute.xlu0 %1095
        %1097 = vrot.lane.b32.xlu0 %v1080, 90
        %v1098 = vpop.permute.xlu0 %1097
        %vm1099 = vcmask 736256
        %v1100 = vsel %vm1099, %v1088, %v1090
        %v1101 = vsel %vm1099, %v1090, %v1092
        %v1102 = vsel %vm1099, %v1094, %v1096
        %v1103 = vsel %vm1099, %v1096, %v1098
        %v1110 = vadd.f32 %v1061, %v1100
        %v1111 = vadd.f32 %v1062, %v1101
        %v1112 = vadd.f32 %v1063, %v1092
        %v1113 = vadd.f32 %v1064, %v1102
        %v1114 = vadd.f32 %v1065, %v1103
        %v1115 = vadd.f32 %v1066, %v1098
        %1117 = vset.pattern.permute.xlu0 0
        %1118 = vperm.xlu0 %1117, %v449
        %v1119 = vpop.permute.xlu0 %1118
        %1122 = vset.pattern.permute.xlu0 0
        %1123 = vperm.xlu0 %1122, %v450
        %v1124 = vpop.permute.xlu0 %1123
        %v1126 = vadd.f32 %v1110, %v1119
        %v1127 = vadd.f32 %v1111, %v1119
        %v1128 = vadd.f32 %v1112, %v1119
        %v1129 = vadd.f32 %v1113, %v1124
        %v1130 = vadd.f32 %v1114, %v1124
        %v1131 = vadd.f32 %v1115, %v1124
        %v1132 = vxor.u32 %v1126, 2147483648
        %v1133 = vxor.u32 %v1127, 2147483648
        %v1134 = vxor.u32 %v1128, 2147483648
        %v1135 = vxor.u32 %v1129, 2147483648
        %v1136 = vxor.u32 %v1130, 2147483648
        %v1137 = vxor.u32 %v1131, 2147483648
        %v1138 = vmul.f32 %v1132, 1.442695
        %v1139 = vpow.pop %v1138
        %v1140 = vmul.f32 %v1133, 1.442695
        %v1141 = vpow.pop %v1140
        %v1142 = vmul.f32 %v1134, 1.442695
        %v1143 = vpow.pop %v1142
        %v1144 = vmul.f32 %v1135, 1.442695
        %v1145 = vpow.pop %v1144
        %v1146 = vmul.f32 %v1136, 1.442695
        %v1147 = vpow.pop %v1146
        %v1148 = vmul.f32 %v1137, 1.442695
        %v1149 = vpow.pop %v1148
        %v1150 = vadd.f32 %v1139, 1.0
        %v1151 = vadd.f32 %v1141, 1.0
        %v1152 = vadd.f32 %v1143, 1.0
        %v1153 = vadd.f32 %v1145, 1.0
        %v1154 = vadd.f32 %v1147, 1.0
        %v1155 = vadd.f32 %v1149, 1.0
        %v1156 = vrcp.pop %v1150
        %v1157 = vmul.f32 1.0, %v1156
        %v1158 = vrcp.pop %v1151
        %v1159 = vmul.f32 1.0, %v1158
        %v1160 = vrcp.pop %v1152
        %v1161 = vmul.f32 1.0, %v1160
        %v1162 = vrcp.pop %v1153
        %v1163 = vmul.f32 1.0, %v1162
        %v1164 = vrcp.pop %v1154
        %v1165 = vmul.f32 1.0, %v1164
        %v1166 = vrcp.pop %v1155
        %v1167 = vmul.f32 1.0, %v1166
        %v1168 = vmul.f32 %v1126, %v1157
        %v1169 = vmul.f32 %v1127, %v1159
        %v1170 = vmul.f32 %v1128, %v1161
        %v1171 = vmul.f32 %v1129, %v1163
        %v1172 = vmul.f32 %v1130, %v1165
        %v1173 = vmul.f32 %v1131, %v1167
        %v1175 = vlaneseq
        %v1176 = vshrl.u32 %v1175, 7
        %v1177 = vsub.s32 0, %v1176
        %v1178 = vrot.slane %v442, %v1177
        %v1179 = vlaneseq
        %v1180 = vshrl.u32 %v1179, 7
        %v1181 = vsub.s32 1, %v1180
        %v1182 = vrot.slane %v442, %v1181
        %v1183 = vlaneseq
        %v1184 = vshrl.u32 %v1183, 7
        %v1185 = vsub.s32 2, %v1184
        %v1186 = vrot.slane %v442, %v1185
        %v1190 = vmul.f32 %v1168, %v1178
        %v1191 = vmul.f32 %v1169, %v1182
        %v1192 = vmul.f32 %v1170, %v1186
        %v1193 = vmul.f32 %v1171, %v1178
        %v1194 = vmul.f32 %v1172, %v1182
        %v1195 = vmul.f32 %v1173, %v1186
        %v1196 = vadd.f32 %v1190, %v1191
        %vm1197 = vcmask 244736
        %v1198 = vsel %vm1197, %v1192, 0.0
        %v1199 = vadd.f32 %v1196, %v1198
        %1200 = vadd.xlane.f32.xlu0 %v1199
        %v1201 = vpop.xlane.xlu0 %1200
        %v1202 = vadd.f32 %v1193, %v1194
        %v1203 = vsel %vm1197, %v1195, 0.0
        %v1204 = vadd.f32 %v1202, %v1203
        %1205 = vadd.xlane.f32.xlu0 %v1204
        %v1206 = vpop.xlane.xlu0 %1205
        %v1207 = vmul.f32 %v1201, 0.00390625
        %v1208 = vmul.f32 %v1206, 0.00390625
        %vm1209 = vcmask 130048
        %v1211 = vsel %vm1209, %v451, 0
        %1213 = vmatprep.subr.mxu0 0.0
        %1214 = vmatpush1.msra.mxu0 %v1207
        %1215 = vmatprep.subr.mxu0 0.0
        %1216 = vmatpush1.msra.mxu0 %v1208
        %1217 = vmatprep.subr.mxu0 0.0
        %1218 = vmatpush1.msra.mxu0 0.0
        %1219 = vmatprep.subr.mxu0 0.0
        %1220 = vmatpush1.msra.mxu0 0.0
        %1221 = vmatprep.subr.mxu0 0.0
        %1222 = vmatpush1.msra.mxu0 0.0
        %1223 = vmatprep.subr.mxu0 0.0
        %1224 = vmatpush1.msra.mxu0 0.0
        %1225 = vmatprep.subr.mxu0 0.0
        %1226 = vmatpush1.msra.mxu0 0.0
        %1227 = vmatprep.subr.mxu0 0.0
        %1228 = vmatpush1.msra.mxu0 0.0
        %1229 = vmatprep.subr.mxu0 0.0
        %1230 = vmatpush1.msra.mxu0 0.0
        %1231 = vmatprep.subr.mxu0 0.0
        %1232 = vmatpush1.msra.mxu0 0.0
        %1233 = vmatprep.subr.mxu0 0.0
        %1234 = vmatpush1.msra.mxu0 0.0
        %1235 = vmatprep.subr.mxu0 0.0
        %1236 = vmatpush1.msra.mxu0 0.0
        %1237 = vmatprep.subr.mxu0 0.0
        %1238 = vmatpush1.msra.mxu0 0.0
        %1239 = vmatprep.subr.mxu0 0.0
        %1240 = vmatpush1.msra.mxu0 0.0
        %1241 = vmatprep.subr.mxu0 0.0
        %1242 = vmatpush1.msra.mxu0 0.0
        %1243 = vmatprep.subr.mxu0 0.0
        %1244 = vmatpush1.msra.mxu0 0.0
        %1245 = vmatprep.subr.mxu0 0.0
        %1246 = vmatpush1.msra.mxu0 0.0
        %1247 = vmatprep.subr.mxu0 0.0
        %1248 = vmatpush1.msra.mxu0 0.0
        %1249 = vmatprep.subr.mxu0 0.0
        %1250 = vmatpush1.msra.mxu0 0.0
        %1251 = vmatprep.subr.mxu0 0.0
        %1252 = vmatpush1.msra.mxu0 0.0
        %1253 = vmatprep.subr.mxu0 0.0
        %1254 = vmatpush1.msra.mxu0 0.0
        %1255 = vmatprep.subr.mxu0 0.0
        %1256 = vmatpush1.msra.mxu0 0.0
        %1257 = vmatprep.subr.mxu0 0.0
        %1258 = vmatpush1.msra.mxu0 0.0
        %1259 = vmatprep.subr.mxu0 0.0
        %1260 = vmatpush1.msra.mxu0 0.0
        %1261 = vmatprep.subr.mxu0 0.0
        %1262 = vmatpush1.msra.mxu0 0.0
        %1263 = vmatprep.subr.mxu0 0.0
        %1264 = vmatpush1.msra.mxu0 0.0
        %1265 = vmatprep.subr.mxu0 0.0
        %1266 = vmatpush1.msra.mxu0 0.0
        %1267 = vmatprep.subr.mxu0 0.0
        %1268 = vmatpush1.msra.mxu0 0.0
        %1269 = vmatprep.subr.mxu0 0.0
        %1270 = vmatpush1.msra.mxu0 0.0
        %1271 = vmatprep.subr.mxu0 0.0
        %1272 = vmatpush1.msra.mxu0 0.0
        %1273 = vmatprep.subr.mxu0 0.0
        %1274 = vmatpush1.msra.mxu0 0.0
        %1275 = vmatprep.subr.mxu0 0.0
        %1276 = vmatpush1.msra.mxu0 0.0
        %1277 = vmatprep.mubr.f32.mxu0 0.0
        %1278 = vmatmul.mubr.f32.gmra.mrb[0].mxu0 %v1211
        %v1279 = vpop.f32.mrb[0].mxu0
        %v1280 = vadd.f32 %v452, %v1279
        %v1281 = vpop.f32.mrb[0].mxu0
        %1282 = vdwg.mxu0
        %v1283 = vxor.u32 %v1280, 2147483648
        %v1284 = vmul.f32 %v1283, 1.442695
        %v1285 = vpow.pop %v1284
        %v1286 = vadd.f32 %v1285, 1.0
        %v1287 = vrcp.pop %v1286
        %v1288 = vmul.f32 1.0, %v1287
        %v1289 = vmul.f32 %v1280, %v1288
        %vm1290 = vcmask 15360
        %v1292 = vsel %vm1290, %v453, 0
        %v1295 = vsel %vm1290, %v454, 0
        %vm1297 = vcmask 1041408
        %v1299 = vsel %vm1297, %v1289, 0
        %1301 = vmatprep.subr.mxu0 0.0
        %1302 = vmatpush1.msra.mxu0 %v1299
        %1303 = vmatprep.subr.mxu0 0.0
        %1304 = vmatpush1.msra.mxu0 0.0
        %1305 = vmatprep.subr.mxu0 0.0
        %1306 = vmatpush1.msra.mxu0 0.0
        %1307 = vmatprep.subr.mxu0 0.0
        %1308 = vmatpush1.msra.mxu0 0.0
        %1309 = vmatprep.subr.mxu0 0.0
        %1310 = vmatpush1.msra.mxu0 0.0
        %1311 = vmatprep.subr.mxu0 0.0
        %1312 = vmatpush1.msra.mxu0 0.0
        %1313 = vmatprep.subr.mxu0 0.0
        %1314 = vmatpush1.msra.mxu0 0.0
        %1315 = vmatprep.subr.mxu0 0.0
        %1316 = vmatpush1.msra.mxu0 0.0
        %1317 = vmatprep.subr.mxu0 0.0
        %1318 = vmatpush1.msra.mxu0 0.0
        %1319 = vmatprep.subr.mxu0 0.0
        %1320 = vmatpush1.msra.mxu0 0.0
        %1321 = vmatprep.subr.mxu0 0.0
        %1322 = vmatpush1.msra.mxu0 0.0
        %1323 = vmatprep.subr.mxu0 0.0
        %1324 = vmatpush1.msra.mxu0 0.0
        %1325 = vmatprep.subr.mxu0 0.0
        %1326 = vmatpush1.msra.mxu0 0.0
        %1327 = vmatprep.subr.mxu0 0.0
        %1328 = vmatpush1.msra.mxu0 0.0
        %1329 = vmatprep.subr.mxu0 0.0
        %1330 = vmatpush1.msra.mxu0 0.0
        %1331 = vmatprep.subr.mxu0 0.0
        %1332 = vmatpush1.msra.mxu0 0.0
        %1333 = vmatprep.subr.mxu0 0.0
        %1334 = vmatpush1.msra.mxu0 0.0
        %1335 = vmatprep.subr.mxu0 0.0
        %1336 = vmatpush1.msra.mxu0 0.0
        %1337 = vmatprep.subr.mxu0 0.0
        %1338 = vmatpush1.msra.mxu0 0.0
        %1339 = vmatprep.subr.mxu0 0.0
        %1340 = vmatpush1.msra.mxu0 0.0
        %1341 = vmatprep.subr.mxu0 0.0
        %1342 = vmatpush1.msra.mxu0 0.0
        %1343 = vmatprep.subr.mxu0 0.0
        %1344 = vmatpush1.msra.mxu0 0.0
        %1345 = vmatprep.subr.mxu0 0.0
        %1346 = vmatpush1.msra.mxu0 0.0
        %1347 = vmatprep.subr.mxu0 0.0
        %1348 = vmatpush1.msra.mxu0 0.0
        %1349 = vmatprep.subr.mxu0 0.0
        %1350 = vmatpush1.msra.mxu0 0.0
        %1351 = vmatprep.subr.mxu0 0.0
        %1352 = vmatpush1.msra.mxu0 0.0
        %1353 = vmatprep.subr.mxu0 0.0
        %1354 = vmatpush1.msra.mxu0 0.0
        %1355 = vmatprep.subr.mxu0 0.0
        %1356 = vmatpush1.msra.mxu0 0.0
        %1357 = vmatprep.subr.mxu0 0.0
        %1358 = vmatpush1.msra.mxu0 0.0
        %1359 = vmatprep.subr.mxu0 0.0
        %1360 = vmatpush1.msra.mxu0 0.0
        %1361 = vmatprep.subr.mxu0 0.0
        %1362 = vmatpush1.msra.mxu0 0.0
        %1363 = vmatprep.subr.mxu0 0.0
        %1364 = vmatpush1.msra.mxu0 0.0
        %1365 = vmatprep.mubr.f32.mxu0 0.0
        %1366 = vmatmul.mubr.f32.gmra.mrb[0].mxu0 %v1292
        %v1367 = vpop.f32.mrb[0].mxu0
        %v1368 = vadd.f32 %v455, %v1367
        %v1369 = vpop.f32.mrb[0].mxu0
        %1370 = vmatprep.mubr.f32.mxu0 0.0
        %1371 = vmatmul.mubr.f32.gmra.mrb[0].mxu0 %v1295
        %v1372 = vpop.f32.mrb[0].mxu0
        %v1373 = vadd.f32 %v456, %v1372
        %v1374 = vpop.f32.mrb[0].mxu0
        %1375 = vdwg.mxu0
        %v1376 = vxor.u32 %v1368, 2147483648
        %v1377 = vxor.u32 %v1373, 2147483648
        %v1378 = vmul.f32 %v1376, 1.442695
        %v1379 = vpow.pop %v1378
        %v1380 = vmul.f32 %v1377, 1.442695
        %v1381 = vpow.pop %v1380
        %v1382 = vadd.f32 %v1379, 1.0
        %v1383 = vadd.f32 %v1381, 1.0
        %v1384 = vrcp.pop %v1382
        %v1385 = vmul.f32 1.0, %v1384
        %v1386 = vrcp.pop %v1383
        %v1387 = vmul.f32 1.0, %v1386
        %1389 = vset.pattern.permute.xlu0 0
        %1390 = vperm.xlu0 %1389, %v1385
        %v1391 = vpop.permute.xlu0 %1390
        %1394 = vset.pattern.permute.xlu0 0
        %1395 = vperm.xlu0 %1394, %v1387
        %v1396 = vpop.permute.xlu0 %1395
        %v1398 = vmul.f32 %v1168, %v1391
        %v1399 = vmul.f32 %v1169, %v1391
        %v1400 = vmul.f32 %v1170, %v1391
        %v1401 = vmul.f32 %v1171, %v1396
        %v1402 = vmul.f32 %v1172, %v1396
        %v1403 = vmul.f32 %v1173, %v1396
        %1405 = vset.pattern.permute.xlu0 0
        %1406 = vperm.xlu0 %1405, %v458
        %v1407 = vpop.permute.xlu0 %1406
        %v1410 = vsel %vm1209, %v457, 0
        %1412 = vmatprep.subr.mxu0 %v1399
        %1413 = vmatpush1.msra.mxu0 %v1398
        %1414 = vmatprep.subr.mxu0 %v1402
        %1415 = vmatpush1.msra.mxu0 %v1401
        %1416 = vmatprep.subr.mxu0 0.0
        %1417 = vmatpush1.msra.mxu0 0.0
        %1418 = vmatprep.subr.mxu0 0.0
        %1419 = vmatpush1.msra.mxu0 0.0
        %1420 = vmatprep.subr.mxu0 0.0
        %1421 = vmatpush1.msra.mxu0 0.0
        %1422 = vmatprep.subr.mxu0 0.0
        %1423 = vmatpush1.msra.mxu0 0.0
        %1424 = vmatprep.subr.mxu0 0.0
        %1425 = vmatpush1.msra.mxu0 0.0
        %1426 = vmatprep.subr.mxu0 0.0
        %1427 = vmatpush1.msra.mxu0 0.0
        %1428 = vmatprep.subr.mxu0 0.0
        %1429 = vmatpush1.msra.mxu0 0.0
        %1430 = vmatprep.subr.mxu0 0.0
        %1431 = vmatpush1.msra.mxu0 0.0
        %1432 = vmatprep.subr.mxu0 0.0
        %1433 = vmatpush1.msra.mxu0 0.0
        %1434 = vmatprep.subr.mxu0 0.0
        %1435 = vmatpush1.msra.mxu0 0.0
        %1436 = vmatprep.subr.mxu0 0.0
        %1437 = vmatpush1.msra.mxu0 0.0
        %1438 = vmatprep.subr.mxu0 0.0
        %1439 = vmatpush1.msra.mxu0 0.0
        %1440 = vmatprep.subr.mxu0 0.0
        %1441 = vmatpush1.msra.mxu0 0.0
        %1442 = vmatprep.subr.mxu0 0.0
        %1443 = vmatpush1.msra.mxu0 0.0
        %1444 = vmatprep.subr.mxu0 0.0
        %1445 = vmatpush1.msra.mxu0 0.0
        %1446 = vmatprep.subr.mxu0 0.0
        %1447 = vmatpush1.msra.mxu0 0.0
        %1448 = vmatprep.subr.mxu0 0.0
        %1449 = vmatpush1.msra.mxu0 0.0
        %1450 = vmatprep.subr.mxu0 0.0
        %1451 = vmatpush1.msra.mxu0 0.0
        %1452 = vmatprep.subr.mxu0 0.0
        %1453 = vmatpush1.msra.mxu0 0.0
        %1454 = vmatprep.subr.mxu0 0.0
        %1455 = vmatpush1.msra.mxu0 0.0
        %1456 = vmatprep.subr.mxu0 0.0
        %1457 = vmatpush1.msra.mxu0 0.0
        %1458 = vmatprep.subr.mxu0 0.0
        %1459 = vmatpush1.msra.mxu0 0.0
        %1460 = vmatprep.subr.mxu0 0.0
        %1461 = vmatpush1.msra.mxu0 0.0
        %1462 = vmatprep.subr.mxu0 0.0
        %1463 = vmatpush1.msra.mxu0 0.0
        %1464 = vmatprep.subr.mxu0 0.0
        %1465 = vmatpush1.msra.mxu0 0.0
        %1466 = vmatprep.subr.mxu0 0.0
        %1467 = vmatpush1.msra.mxu0 0.0
        %1468 = vmatprep.subr.mxu0 0.0
        %1469 = vmatpush1.msra.mxu0 0.0
        %1470 = vmatprep.subr.mxu0 0.0
        %1471 = vmatpush1.msra.mxu0 0.0
        %1472 = vmatprep.subr.mxu0 0.0
        %1473 = vmatpush1.msra.mxu0 0.0
        %1474 = vmatprep.subr.mxu0 0.0
        %1475 = vmatpush1.msra.mxu0 0.0
        %1476 = vmatprep.mubr.f32.mxu0 0.0
        %1477 = vmatmul.mubr.f32.gmra.mrb[0].mxu0 %v1410
        %v1478 = vpop.f32.mrb[0].mxu0
        %v1479 = vadd.f32 %v1407, %v1478
        %v1480 = vpop.f32.mrb[0].mxu0
        %v1481 = vadd.f32 %v1407, %v1480
        %1482 = vdwg.mxu0
        %1483 = vmatprep.subr.mxu0 0.0
        %1484 = vmatpush1.msra.mxu0 %v1400
        %1485 = vmatprep.subr.mxu0 0.0
        %1486 = vmatpush1.msra.mxu0 %v1403
        %1487 = vmatprep.subr.mxu0 0.0
        %1488 = vmatpush1.msra.mxu0 0.0
        %1489 = vmatprep.subr.mxu0 0.0
        %1490 = vmatpush1.msra.mxu0 0.0
        %1491 = vmatprep.subr.mxu0 0.0
        %1492 = vmatpush1.msra.mxu0 0.0
        %1493 = vmatprep.subr.mxu0 0.0
        %1494 = vmatpush1.msra.mxu0 0.0
        %1495 = vmatprep.subr.mxu0 0.0
        %1496 = vmatpush1.msra.mxu0 0.0
        %1497 = vmatprep.subr.mxu0 0.0
        %1498 = vmatpush1.msra.mxu0 0.0
        %1499 = vmatprep.subr.mxu0 0.0
        %1500 = vmatpush1.msra.mxu0 0.0
        %1501 = vmatprep.subr.mxu0 0.0
        %1502 = vmatpush1.msra.mxu0 0.0
        %1503 = vmatprep.subr.mxu0 0.0
        %1504 = vmatpush1.msra.mxu0 0.0
        %1505 = vmatprep.subr.mxu0 0.0
        %1506 = vmatpush1.msra.mxu0 0.0
        %1507 = vmatprep.subr.mxu0 0.0
        %1508 = vmatpush1.msra.mxu0 0.0
        %1509 = vmatprep.subr.mxu0 0.0
        %1510 = vmatpush1.msra.mxu0 0.0
        %1511 = vmatprep.subr.mxu0 0.0
        %1512 = vmatpush1.msra.mxu0 0.0
        %1513 = vmatprep.subr.mxu0 0.0
        %1514 = vmatpush1.msra.mxu0 0.0
        %1515 = vmatprep.subr.mxu0 0.0
        %1516 = vmatpush1.msra.mxu0 0.0
        %1517 = vmatprep.subr.mxu0 0.0
        %1518 = vmatpush1.msra.mxu0 0.0
        %1519 = vmatprep.subr.mxu0 0.0
        %1520 = vmatpush1.msra.mxu0 0.0
        %1521 = vmatprep.subr.mxu0 0.0
        %1522 = vmatpush1.msra.mxu0 0.0
        %1523 = vmatprep.subr.mxu0 0.0
        %1524 = vmatpush1.msra.mxu0 0.0
        %1525 = vmatprep.subr.mxu0 0.0
        %1526 = vmatpush1.msra.mxu0 0.0
        %1527 = vmatprep.subr.mxu0 0.0
        %1528 = vmatpush1.msra.mxu0 0.0
        %1529 = vmatprep.subr.mxu0 0.0
        %1530 = vmatpush1.msra.mxu0 0.0
        %1531 = vmatprep.subr.mxu0 0.0
        %1532 = vmatpush1.msra.mxu0 0.0
        %1533 = vmatprep.subr.mxu0 0.0
        %1534 = vmatpush1.msra.mxu0 0.0
        %1535 = vmatprep.subr.mxu0 0.0
        %1536 = vmatpush1.msra.mxu0 0.0
        %1537 = vmatprep.subr.mxu0 0.0
        %1538 = vmatpush1.msra.mxu0 0.0
        %1539 = vmatprep.subr.mxu0 0.0
        %1540 = vmatpush1.msra.mxu0 0.0
        %1541 = vmatprep.subr.mxu0 0.0
        %1542 = vmatpush1.msra.mxu0 0.0
        %1543 = vmatprep.subr.mxu0 0.0
        %1544 = vmatpush1.msra.mxu0 0.0
        %1545 = vmatprep.subr.mxu0 0.0
        %1546 = vmatpush1.msra.mxu0 0.0
        %1547 = vmatprep.mubr.f32.mxu0 0.0
        %1548 = vmatmul.mubr.f32.gmra.mrb[0].mxu0 %v1410
        %v1549 = vpop.f32.mrb[0].mxu0
        %v1550 = vadd.f32 %v1407, %v1549
        %v1551 = vpop.f32.mrb[0].mxu0
        %1552 = vdwg.mxu0
        %1553 = vrot.lane.b32.xlu0 %v439, 109
        %v1554 = vpop.permute.xlu0 %1553
        %1555 = vrot.lane.b32.xlu0 %v471, 109
        %v1556 = vpop.permute.xlu0 %1555
        %1557 = vrot.lane.b32.xlu0 %v440, 109
        %v1558 = vpop.permute.xlu0 %1557
        %v1559 = vsel %vm903, %v1554, %v1556
        %v1560 = vsel %vm903, %v1556, %v1558
        %v1564 = vadd.f32 %v1479, %v1559
        %v1565 = vadd.f32 %v1481, %v1560
        %v1566 = vadd.f32 %v1550, %v1558
        %v1569 = vcombine.low %v1564, %v1565
        %1571 = vst [vmem:[%s433] sm:$0xff] %v1569
        %vm1572 = vcmask 240640
        %1573 = vst.msk [vmem:[%s433 + $0x8] sm:$0xf] %vm1572, %v1566
        %s1574 = sand.u32 %s313, 1
        %s1575 = scalar_lea.sflag [#allocation3], %s1574
        %s1576 = sand.u32 %s313, 1
        %s1577 = smul.addr %s1576, 12
        %s1578 = scalar_lea.vmem [#allocation2], %s1577
        // Predicated region
        $region73: #{tpu_custom_call.1} parent=71 // pred_check
          %p1579 = pneg %p323
        $region74: #{tpu_custom_call.1} parent=71 // pred_check_branch
          %1581 = sbr.rel (%p1579) target = $region76
        $region75: #{tpu_custom_call.1} parent=71 // pred_region
          %s1583 = ssub.s32 192, 192
          %1584 = vsyncadd %s1575, %s1583
          %s1585 = smul.addr %s27, 3
          %s1586 = smul.addr %s1585, 64
          %s1587 = scalar_lea.hbm %s13, %s1586
          %s1589 = sshll.u32 %s1578, 4
          %s1590 = int_to_ptr.vmem [resolvable:$true] %s1589
          %1592 = dma.vmem_to_hbm [thread:$0]  %s1590, 192, %s1587, %s1575
        $region76: #{tpu_custom_call.1} parent=71 // pred_fallthru
          _
      $region72: #{tpu_custom_call.1} parent=5 // pred_fallthru
        _
      %p1593 = scmp.le.s32.totalorder 2, %s22
      // Predicated region
      $region77: #{tpu_custom_call.1} parent=5 // pred_check
        %p1594 = pneg %p1593
      $region78: #{tpu_custom_call.1} parent=5 // pred_check_branch
        %1596 = sbr.rel (%p1594) target = $region80
      $region79: #{tpu_custom_call.1} parent=5 // pred_region
        %s1597 = ssub.s32 %s22, 2
        // Predicated region
        $region81: #{tpu_custom_call.1} parent=79 // pred_check
          %p1598 = pneg %p329
        $region82: #{tpu_custom_call.1} parent=79 // pred_check_branch
          %1600 = sbr.rel (%p1598) target = $region84
        $region83: #{tpu_custom_call.1} parent=79 // pred_region
          %s1601 = sand.u32 %s314, 1
          %s1602 = scalar_lea.sflag [#allocation3], %s1601
          %s1603 = sand.u32 %s314, 1
          %s1604 = smul.addr %s1603, 12
          %s1605 = scalar_lea.vmem [#allocation2], %s1604
          %1606 = dma.done %s1602, 192
        $region84: #{tpu_custom_call.1} parent=79 // pred_fallthru
          _
      $region80: #{tpu_custom_call.1} parent=5 // pred_fallthru
        _
    $region6: #{tpu_custom_call.1} parent=1 // loop_footer
      %s26 = sadd.s32 1, %s22
    $region7: #{tpu_custom_call.1} parent=1 // loop_footer_branch
      %21 = sbr.rel target = $region3
    $region8: #{tpu_custom_call.1} parent=1 // loop_exit
      _
    %1607 = vsyncpa [#allocation3], 1
    %s1608 = scalar_lea.sflag [#allocation3], 1
    %1609 = vsyncpa %s1608, 1

</llo_original>
